<compile_context>
chip_gen: v6e
topology: v6e:2x2x1
jax: 0.10.0
libtpu: 0.0.40
codegen_flags: <defaults>
</compile_context>

<pallas_src>
import jax
import jax.numpy as jnp
from jax.experimental import pallas as pl
from jax.experimental.pallas import tpu as pltpu

# ----------------------------- model config ---------------------------------
INPUT_SIZE = 16      # vocab size
HIDDEN_SIZE = 32
OUTPUT_SIZE = 10
EMBEDDING_DIM = 32
NUM_LAYERS = 2
DROPOUT = 0.1        # nn.RNN dropout only acts in training mode; eval forward => no-op
BATCH = 2
SEQ = 8

_NEG_BIG = -1e30     # "-inf" stand-in for padded logit columns (exp underflows to 0.0)


def _round_up(x, m):
    return ((x + m - 1) // m) * m


# --------------------------- one-time param packing --------------------------
def pack_params(params):
    """Pack SimpleRNN params into a single flat (R, H) f32 blob + static offsets.

    Done ONCE at init time (not per forward call):
      * embedding folded into layer-0 input projection: proj0 = E @ W_ih0^T   (V, H)
      * all weights pre-transposed for right-multiplication (x @ W)
      * biases pre-summed (b_ih + b_hh)
      * fc weight zero-padded on lanes, fc bias padded with -1e30 on lanes so the
        in-kernel log_softmax over the padded lane width is exact
      * every section starts at a sublane-aligned (multiple-of-8) row offset
    """
    emb = params["embedding"]
    rnn = params["rnn"]
    L = len(rnn)
    H = rnn[0]["w_hh"].shape[0]
    V = emb.shape[0]
    O = params["fc_w"].shape[0]

    rows, offsets = [], {}
    cursor = 0

    def add(name, arr, col_pad=0.0):
        nonlocal cursor
        a = jnp.asarray(arr, jnp.float32)
        r, c = a.shape
        assert c <= H, f"section {name} wider than blob ({c} > {H})"
        if c < H:
            a = jnp.concatenate([a, jnp.full((r, H - c), col_pad, jnp.float32)], axis=1)
        r_pad = _round_up(r, 8)
        if r_pad > r:
            a = jnp.concatenate([a, jnp.zeros((r_pad - r, H), jnp.float32)], axis=0)
        offsets[name] = cursor
        rows.append(a)
        cursor += r_pad

    add("proj0", emb @ rnn[0]["w_ih"].T)                       # (V, H)
    for l in range(L):
        add(f"w_hh{l}", rnn[l]["w_hh"].T)                      # (H, H)
        if l > 0:
            add(f"w_ih{l}", rnn[l]["w_ih"].T)                  # (H, H)
        add(f"bias{l}", rnn[l]["b_ih"] + rnn[l]["b_hh"])       # (1, H)
    add("fc_w", params["fc_w"].T)                              # (H, O) zero-padded lanes
    add("fc_b", params["fc_b"], col_pad=_NEG_BIG)              # (1, O) -1e30-padded lanes

    blob = jnp.concatenate(rows, axis=0)                       # (R, H): single DMA payload
    meta = {"L": L, "H": H, "V": V, "O": O, "offsets": offsets}
    return blob, meta


# --------------------------------- kernel ------------------------------------
def _make_kernel(meta, batch, seq):
    """Kernel closed over static layer count / shapes / blob offsets (fully unrolled)."""
    L, H, O = meta["L"], meta["H"], meta["O"]
    off = meta["offsets"]

    def kernel(tok_ref, blob_ref, out_ref):
        # tok_ref  : (B, T) int32 in SMEM (scalar-indexed reads are free scalar work)
        # blob_ref : (R, H) f32 in VMEM, packed weights (see pack_params)
        # out_ref  : (B, O) f32 log-probs
        f32 = jnp.float32

        # ---- static ref-view loads of the packed weights (loop-invariant) ----
        w_hh = [blob_ref[pl.ds(off[f"w_hh{l}"], H), :] for l in range(L)]          # (H,H)
        w_ih = [None] + [blob_ref[pl.ds(off[f"w_ih{l}"], H), :] for l in range(1, L)]
        bias = [blob_ref[pl.ds(off[f"bias{l}"], 1), :] for l in range(L)]          # (1,H)
        fc_w = blob_ref[pl.ds(off["fc_w"], H), :]        # (H, H); cols >= O are zero
        fc_b = blob_ref[pl.ds(off["fc_b"], 1), :]        # (1, H); cols >= O are -1e30

        # ---- layer-0 pre-activations: embedding gather folded into proj0 ----
        # Each (t, b) row is one dynamic-offset single-sublane VMEM load keyed by the
        # SMEM token id; all loads are off the recurrence critical path.
        p0 = off["proj0"]
        xw0 = []
        for t in range(seq):
            rows = [blob_ref[pl.ds(p0 + tok_ref[b, t], 1), :] for b in range(batch)]
            xw0.append(jnp.concatenate(rows, axis=0) + bias[0])                    # (B,H)

        # ---- stacked tanh recurrence: one unrolled t-loop, all layers inside ----
        # Per-step inter-layer handoff => layer l @ t only depends on layer l-1 @ t,
        # so the scheduler can run layer l-1 @ t+1 alongside layer l @ t (wavefront).
        # TODO(synk): nn.RNN inter-layer dropout (training only) omitted; eval-mode
        # forward semantics are reproduced exactly.
        # TODO(synk): if the bundle dump shows a redundant W_hh push per step, switch the
        # recurrent dot to pltpu.matmul_push_rhs / matmul_acc_lhs / matmul_pop.
        h = [None] * L
        sum_h = jnp.zeros((batch, H), f32)
        for t in range(seq):
            if t == 0:
                h[0] = jnp.tanh(xw0[0])                          # initial hidden is zero
            else:
                h[0] = jnp.tanh(
                    xw0[t] + jnp.dot(h[0], w_hh[0], preferred_element_type=f32))
            for l in range(1, L):
                pre = jnp.dot(h[l - 1], w_ih[l], preferred_element_type=f32) + bias[l]
                if t > 0:
                    pre = pre + jnp.dot(h[l], w_hh[l], preferred_element_type=f32)
                h[l] = jnp.tanh(pre)
            sum_h = sum_h + h[L - 1]

        # ---- mean over time, fc, log_softmax (padded lanes carry -1e30 bias) ----
        pooled = sum_h * f32(1.0 / seq)                                            # (B,H)
        logits = jnp.dot(pooled, fc_w, preferred_element_type=f32) + fc_b          # (B,H)
        m = jnp.max(logits, axis=-1, keepdims=True)
        shifted = logits - m
        lse = jnp.log(jnp.sum(jnp.exp(shifted), axis=-1, keepdims=True))
        out_ref[...] = (shifted - lse)[:, :O]

    return kernel


# --------------------------------- wrapper -----------------------------------
def simple_rnn_forward(x_tokens, blob, meta, labels=None):
    """Replicates SimpleRNN.forward (eval mode). Per-call work = one pallas_call."""
    B, T = x_tokens.shape
    O = meta["O"]
    kernel = _make_kernel(meta, B, T)

    # TODO(synk): on v7x add a "parallel" grid axis over batch groups once B is
    # non-trivial so the second TensorCore is used; pointless at B=2.
    logits = pl.pallas_call(
        kernel,
        out_shape=jax.ShapeDtypeStruct((B, O), jnp.float32),
        in_specs=[
            pl.BlockSpec(memory_space=pltpu.MemorySpace.SMEM),   # token ids (B, T) int32
            pl.BlockSpec(memory_space=pltpu.MemorySpace.VMEM),   # packed weight blob
        ],
        out_specs=pl.BlockSpec(memory_space=pltpu.MemorySpace.VMEM),
    )(x_tokens.astype(jnp.int32), blob)

    output = {"logits": logits}
    if labels is not None:
        # nn.CrossEntropyLoss applied to already-log-softmaxed logits (it applies
        # log_softmax AGAIN) -- intentionally matches the quirky PyTorch reference.
        ls = jax.nn.log_softmax(logits, axis=-1)
        loss = -jnp.mean(ls[jnp.arange(labels.shape[0]), labels])
        output["loss"] = loss
    return output


# ----------------------------- pure-JAX reference ----------------------------
def reference_forward(x_tokens, params, labels=None):
    emb = params["embedding"][x_tokens]                          # (B, T, E)
    B, T, _ = emb.shape
    h_in = emb
    for layer in params["rnn"]:
        w_ih, w_hh = layer["w_ih"], layer["w_hh"]
        b = layer["b_ih"] + layer["b_hh"]
        H = w_hh.shape[0]
        h = jnp.zeros((B, H), jnp.float32)
        outs = []
        for t in range(T):
            h = jnp.tanh(h_in[:, t, :] @ w_ih.T + h @ w_hh.T + b)
            outs.append(h)
        h_in = jnp.stack(outs, axis=1)
    pooled = jnp.mean(h_in, axis=1)
    logits = jax.nn.log_softmax(pooled @ params["fc_w"].T + params["fc_b"], axis=-1)
    out = {"logits": logits}
    if labels is not None:
        ls = jax.nn.log_softmax(logits, axis=-1)
        out["loss"] = -jnp.mean(ls[jnp.arange(labels.shape[0]), labels])
    return out


# ------------------------------- param init ----------------------------------
def init_params(key):
    ks = jax.random.split(key, 4 + 4 * NUM_LAYERS)
    params = {}
    params["embedding"] = 0.1 * jax.random.normal(
        ks[0], (INPUT_SIZE, EMBEDDING_DIM), jnp.float32)

    rnn_layers = []
    k_idx = 1
    for layer in range(NUM_LAYERS):
        in_dim = EMBEDDING_DIM if layer == 0 else HIDDEN_SIZE
        w_ih = 0.1 * jax.random.normal(ks[k_idx], (HIDDEN_SIZE, in_dim), jnp.float32)
        w_hh = 0.1 * jax.random.normal(ks[k_idx + 1], (HIDDEN_SIZE, HIDDEN_SIZE), jnp.float32)
        b_ih = 0.1 * jax.random.normal(ks[k_idx + 2], (1, HIDDEN_SIZE), jnp.float32)
        b_hh = 0.1 * jax.random.normal(ks[k_idx + 3], (1, HIDDEN_SIZE), jnp.float32)
        k_idx += 4
        rnn_layers.append({"w_ih": w_ih, "w_hh": w_hh, "b_ih": b_ih, "b_hh": b_hh})
    params["rnn"] = rnn_layers

    params["fc_w"] = 0.1 * jax.random.normal(ks[k_idx], (OUTPUT_SIZE, HIDDEN_SIZE), jnp.float32)
    params["fc_b"] = 0.1 * jax.random.normal(ks[k_idx + 1], (1, OUTPUT_SIZE), jnp.float32)
    return params


if __name__ == "__main__":
    key = jax.random.PRNGKey(0)
    k_param, k_x, k_lab = jax.random.split(key, 3)

    params = init_params(k_param)
    blob, meta = pack_params(params)        # one-time packing (NOT per forward call)

    x = jax.random.randint(k_x, (BATCH, SEQ), 0, INPUT_SIZE, dtype=jnp.int32)
    labels = jax.random.randint(k_lab, (BATCH,), 0, OUTPUT_SIZE, dtype=jnp.int32)

    out = simple_rnn_forward(x, blob, meta, labels=labels)
    jax.block_until_ready(out["logits"])
    jax.block_until_ready(out["loss"])

    ref = reference_forward(x, params, labels=labels)

    assert out["logits"].shape == (BATCH, OUTPUT_SIZE)
    assert bool(jnp.all(jnp.isfinite(out["logits"])))
    # log_softmax rows must (approximately) exponentiate-sum to 1
    assert jnp.allclose(jnp.sum(jnp.exp(out["logits"]), axis=-1), 1.0, atol=1e-5)
    # match the pure-JAX reference (tolerance covers default-precision bf16 MXU passes)
    assert jnp.allclose(out["logits"], ref["logits"], atol=3e-2)
    assert jnp.allclose(out["loss"], ref["loss"], atol=3e-2)
    print("KERNEL_OK")
</pallas_src>

<mosaic_0001>
module attributes {stable_mosaic.version = 11 : i64} {
  func.func @kernel(%arg0: memref<2x8xi32, #tpu.memory_space<smem>>, %arg1: memref<168x32xf32, #tpu.memory_space<vmem>>, %arg2: memref<2x10xf32, #tpu.memory_space<vmem>>) attributes {dimension_semantics = [], scalar_prefetch = 0 : i64, scratch_operands = 0 : i64, tpu.core_type = #tpu.core_type<tc>} {
    %c16 = arith.constant 16 : index
    %c0 = arith.constant 0 : index
    %0 = vector.load %arg1[%c16, %c0] : memref<168x32xf32, #tpu.memory_space<vmem>>, vector<32x32xf32>
    %c56 = arith.constant 56 : index
    %c0_0 = arith.constant 0 : index
    %1 = vector.load %arg1[%c56, %c0_0] : memref<168x32xf32, #tpu.memory_space<vmem>>, vector<32x32xf32>
    %c88 = arith.constant 88 : index
    %c0_1 = arith.constant 0 : index
    %2 = vector.load %arg1[%c88, %c0_1] : memref<168x32xf32, #tpu.memory_space<vmem>>, vector<32x32xf32>
    %c48 = arith.constant 48 : index
    %c0_2 = arith.constant 0 : index
    %3 = vector.load %arg1[%c48, %c0_2] : memref<168x32xf32, #tpu.memory_space<vmem>>, vector<1x32xf32>
    %c120 = arith.constant 120 : index
    %c0_3 = arith.constant 0 : index
    %4 = vector.load %arg1[%c120, %c0_3] : memref<168x32xf32, #tpu.memory_space<vmem>>, vector<1x32xf32>
    %c128 = arith.constant 128 : index
    %c0_4 = arith.constant 0 : index
    %5 = vector.load %arg1[%c128, %c0_4] : memref<168x32xf32, #tpu.memory_space<vmem>>, vector<32x32xf32>
    %c160 = arith.constant 160 : index
    %c0_5 = arith.constant 0 : index
    %6 = vector.load %arg1[%c160, %c0_5] : memref<168x32xf32, #tpu.memory_space<vmem>>, vector<1x32xf32>
    %c0_6 = arith.constant 0 : index
    %c0_7 = arith.constant 0 : index
    %7 = memref.load %arg0[%c0_6, %c0_7] : memref<2x8xi32, #tpu.memory_space<smem>>
    %c0_i32 = arith.constant 0 : i32
    %8 = arith.addi %c0_i32, %7 : i32
    %9 = arith.index_cast %8 : i32 to index
    %c0_8 = arith.constant 0 : index
    %10 = vector.load %arg1[%9, %c0_8] : memref<168x32xf32, #tpu.memory_space<vmem>>, vector<1x32xf32>
    %c1 = arith.constant 1 : index
    %c0_9 = arith.constant 0 : index
    %11 = memref.load %arg0[%c1, %c0_9] : memref<2x8xi32, #tpu.memory_space<smem>>
    %c0_i32_10 = arith.constant 0 : i32
    %12 = arith.addi %c0_i32_10, %11 : i32
    %13 = arith.index_cast %12 : i32 to index
    %c0_11 = arith.constant 0 : index
    %14 = vector.load %arg1[%13, %c0_11] : memref<168x32xf32, #tpu.memory_space<vmem>>, vector<1x32xf32>
    %15 = tpu.concatenate %10, %14 in 0 : vector<1x32xf32>, vector<1x32xf32> -> vector<2x32xf32>
    %16 = vector.broadcast %3 : vector<1x32xf32> to vector<2x32xf32>
    %17 = arith.addf %15, %16 : vector<2x32xf32>
    %c0_12 = arith.constant 0 : index
    %c1_13 = arith.constant 1 : index
    %18 = memref.load %arg0[%c0_12, %c1_13] : memref<2x8xi32, #tpu.memory_space<smem>>
    %c0_i32_14 = arith.constant 0 : i32
    %19 = arith.addi %c0_i32_14, %18 : i32
    %20 = arith.index_cast %19 : i32 to index
    %c0_15 = arith.constant 0 : index
    %21 = vector.load %arg1[%20, %c0_15] : memref<168x32xf32, #tpu.memory_space<vmem>>, vector<1x32xf32>
    %c1_16 = arith.constant 1 : index
    %c1_17 = arith.constant 1 : index
    %22 = memref.load %arg0[%c1_16, %c1_17] : memref<2x8xi32, #tpu.memory_space<smem>>
    %c0_i32_18 = arith.constant 0 : i32
    %23 = arith.addi %c0_i32_18, %22 : i32
    %24 = arith.index_cast %23 : i32 to index
    %c0_19 = arith.constant 0 : index
    %25 = vector.load %arg1[%24, %c0_19] : memref<168x32xf32, #tpu.memory_space<vmem>>, vector<1x32xf32>
    %26 = tpu.concatenate %21, %25 in 0 : vector<1x32xf32>, vector<1x32xf32> -> vector<2x32xf32>
    %27 = vector.broadcast %3 : vector<1x32xf32> to vector<2x32xf32>
    %28 = arith.addf %26, %27 : vector<2x32xf32>
    %c0_20 = arith.constant 0 : index
    %c2 = arith.constant 2 : index
    %29 = memref.load %arg0[%c0_20, %c2] : memref<2x8xi32, #tpu.memory_space<smem>>
    %c0_i32_21 = arith.constant 0 : i32
    %30 = arith.addi %c0_i32_21, %29 : i32
    %31 = arith.index_cast %30 : i32 to index
    %c0_22 = arith.constant 0 : index
    %32 = vector.load %arg1[%31, %c0_22] : memref<168x32xf32, #tpu.memory_space<vmem>>, vector<1x32xf32>
    %c1_23 = arith.constant 1 : index
    %c2_24 = arith.constant 2 : index
    %33 = memref.load %arg0[%c1_23, %c2_24] : memref<2x8xi32, #tpu.memory_space<smem>>
    %c0_i32_25 = arith.constant 0 : i32
    %34 = arith.addi %c0_i32_25, %33 : i32
    %35 = arith.index_cast %34 : i32 to index
    %c0_26 = arith.constant 0 : index
    %36 = vector.load %arg1[%35, %c0_26] : memref<168x32xf32, #tpu.memory_space<vmem>>, vector<1x32xf32>
    %37 = tpu.concatenate %32, %36 in 0 : vector<1x32xf32>, vector<1x32xf32> -> vector<2x32xf32>
    %38 = vector.broadcast %3 : vector<1x32xf32> to vector<2x32xf32>
    %39 = arith.addf %37, %38 : vector<2x32xf32>
    %c0_27 = arith.constant 0 : index
    %c3 = arith.constant 3 : index
    %40 = memref.load %arg0[%c0_27, %c3] : memref<2x8xi32, #tpu.memory_space<smem>>
    %c0_i32_28 = arith.constant 0 : i32
    %41 = arith.addi %c0_i32_28, %40 : i32
    %42 = arith.index_cast %41 : i32 to index
    %c0_29 = arith.constant 0 : index
    %43 = vector.load %arg1[%42, %c0_29] : memref<168x32xf32, #tpu.memory_space<vmem>>, vector<1x32xf32>
    %c1_30 = arith.constant 1 : index
    %c3_31 = arith.constant 3 : index
    %44 = memref.load %arg0[%c1_30, %c3_31] : memref<2x8xi32, #tpu.memory_space<smem>>
    %c0_i32_32 = arith.constant 0 : i32
    %45 = arith.addi %c0_i32_32, %44 : i32
    %46 = arith.index_cast %45 : i32 to index
    %c0_33 = arith.constant 0 : index
    %47 = vector.load %arg1[%46, %c0_33] : memref<168x32xf32, #tpu.memory_space<vmem>>, vector<1x32xf32>
    %48 = tpu.concatenate %43, %47 in 0 : vector<1x32xf32>, vector<1x32xf32> -> vector<2x32xf32>
    %49 = vector.broadcast %3 : vector<1x32xf32> to vector<2x32xf32>
    %50 = arith.addf %48, %49 : vector<2x32xf32>
    %c0_34 = arith.constant 0 : index
    %c4 = arith.constant 4 : index
    %51 = memref.load %arg0[%c0_34, %c4] : memref<2x8xi32, #tpu.memory_space<smem>>
    %c0_i32_35 = arith.constant 0 : i32
    %52 = arith.addi %c0_i32_35, %51 : i32
    %53 = arith.index_cast %52 : i32 to index
    %c0_36 = arith.constant 0 : index
    %54 = vector.load %arg1[%53, %c0_36] : memref<168x32xf32, #tpu.memory_space<vmem>>, vector<1x32xf32>
    %c1_37 = arith.constant 1 : index
    %c4_38 = arith.constant 4 : index
    %55 = memref.load %arg0[%c1_37, %c4_38] : memref<2x8xi32, #tpu.memory_space<smem>>
    %c0_i32_39 = arith.constant 0 : i32
    %56 = arith.addi %c0_i32_39, %55 : i32
    %57 = arith.index_cast %56 : i32 to index
    %c0_40 = arith.constant 0 : index
    %58 = vector.load %arg1[%57, %c0_40] : memref<168x32xf32, #tpu.memory_space<vmem>>, vector<1x32xf32>
    %59 = tpu.concatenate %54, %58 in 0 : vector<1x32xf32>, vector<1x32xf32> -> vector<2x32xf32>
    %60 = vector.broadcast %3 : vector<1x32xf32> to vector<2x32xf32>
    %61 = arith.addf %59, %60 : vector<2x32xf32>
    %c0_41 = arith.constant 0 : index
    %c5 = arith.constant 5 : index
    %62 = memref.load %arg0[%c0_41, %c5] : memref<2x8xi32, #tpu.memory_space<smem>>
    %c0_i32_42 = arith.constant 0 : i32
    %63 = arith.addi %c0_i32_42, %62 : i32
    %64 = arith.index_cast %63 : i32 to index
    %c0_43 = arith.constant 0 : index
    %65 = vector.load %arg1[%64, %c0_43] : memref<168x32xf32, #tpu.memory_space<vmem>>, vector<1x32xf32>
    %c1_44 = arith.constant 1 : index
    %c5_45 = arith.constant 5 : index
    %66 = memref.load %arg0[%c1_44, %c5_45] : memref<2x8xi32, #tpu.memory_space<smem>>
    %c0_i32_46 = arith.constant 0 : i32
    %67 = arith.addi %c0_i32_46, %66 : i32
    %68 = arith.index_cast %67 : i32 to index
    %c0_47 = arith.constant 0 : index
    %69 = vector.load %arg1[%68, %c0_47] : memref<168x32xf32, #tpu.memory_space<vmem>>, vector<1x32xf32>
    %70 = tpu.concatenate %65, %69 in 0 : vector<1x32xf32>, vector<1x32xf32> -> vector<2x32xf32>
    %71 = vector.broadcast %3 : vector<1x32xf32> to vector<2x32xf32>
    %72 = arith.addf %70, %71 : vector<2x32xf32>
    %c0_48 = arith.constant 0 : index
    %c6 = arith.constant 6 : index
    %73 = memref.load %arg0[%c0_48, %c6] : memref<2x8xi32, #tpu.memory_space<smem>>
    %c0_i32_49 = arith.constant 0 : i32
    %74 = arith.addi %c0_i32_49, %73 : i32
    %75 = arith.index_cast %74 : i32 to index
    %c0_50 = arith.constant 0 : index
    %76 = vector.load %arg1[%75, %c0_50] : memref<168x32xf32, #tpu.memory_space<vmem>>, vector<1x32xf32>
    %c1_51 = arith.constant 1 : index
    %c6_52 = arith.constant 6 : index
    %77 = memref.load %arg0[%c1_51, %c6_52] : memref<2x8xi32, #tpu.memory_space<smem>>
    %c0_i32_53 = arith.constant 0 : i32
    %78 = arith.addi %c0_i32_53, %77 : i32
    %79 = arith.index_cast %78 : i32 to index
    %c0_54 = arith.constant 0 : index
    %80 = vector.load %arg1[%79, %c0_54] : memref<168x32xf32, #tpu.memory_space<vmem>>, vector<1x32xf32>
    %81 = tpu.concatenate %76, %80 in 0 : vector<1x32xf32>, vector<1x32xf32> -> vector<2x32xf32>
    %82 = vector.broadcast %3 : vector<1x32xf32> to vector<2x32xf32>
    %83 = arith.addf %81, %82 : vector<2x32xf32>
    %c0_55 = arith.constant 0 : index
    %c7 = arith.constant 7 : index
    %84 = memref.load %arg0[%c0_55, %c7] : memref<2x8xi32, #tpu.memory_space<smem>>
    %c0_i32_56 = arith.constant 0 : i32
    %85 = arith.addi %c0_i32_56, %84 : i32
    %86 = arith.index_cast %85 : i32 to index
    %c0_57 = arith.constant 0 : index
    %87 = vector.load %arg1[%86, %c0_57] : memref<168x32xf32, #tpu.memory_space<vmem>>, vector<1x32xf32>
    %c1_58 = arith.constant 1 : index
    %c7_59 = arith.constant 7 : index
    %88 = memref.load %arg0[%c1_58, %c7_59] : memref<2x8xi32, #tpu.memory_space<smem>>
    %c0_i32_60 = arith.constant 0 : i32
    %89 = arith.addi %c0_i32_60, %88 : i32
    %90 = arith.index_cast %89 : i32 to index
    %c0_61 = arith.constant 0 : index
    %91 = vector.load %arg1[%90, %c0_61] : memref<168x32xf32, #tpu.memory_space<vmem>>, vector<1x32xf32>
    %92 = tpu.concatenate %87, %91 in 0 : vector<1x32xf32>, vector<1x32xf32> -> vector<2x32xf32>
    %93 = vector.broadcast %3 : vector<1x32xf32> to vector<2x32xf32>
    %94 = arith.addf %92, %93 : vector<2x32xf32>
    %cst = arith.constant 0.000000e+00 : f32
    %95 = vector.broadcast %cst : f32 to vector<2x32xf32>
    %96 = math.tanh %17 : vector<2x32xf32>
    %cst_62 = arith.constant dense<0.000000e+00> : vector<2x32xf32>
    %97 = tpu.matmul %96, %2, %cst_62 {dimension_numbers = #tpu.dot_dimension_numbers<[1], [0], [0], [1], [0, 0, 1, 1], [], []>} : vector<2x32xf32>, vector<32x32xf32>, vector<2x32xf32> -> vector<2x32xf32>
    %98 = vector.broadcast %4 : vector<1x32xf32> to vector<2x32xf32>
    %99 = arith.addf %97, %98 : vector<2x32xf32>
    %100 = math.tanh %99 : vector<2x32xf32>
    %101 = arith.addf %95, %100 : vector<2x32xf32>
    %cst_63 = arith.constant dense<0.000000e+00> : vector<2x32xf32>
    %102 = tpu.matmul %96, %0, %cst_63 {dimension_numbers = #tpu.dot_dimension_numbers<[1], [0], [0], [1], [0, 0, 1, 1], [], []>} : vector<2x32xf32>, vector<32x32xf32>, vector<2x32xf32> -> vector<2x32xf32>
    %103 = arith.addf %28, %102 : vector<2x32xf32>
    %104 = math.tanh %103 : vector<2x32xf32>
    %cst_64 = arith.constant dense<0.000000e+00> : vector<2x32xf32>
    %105 = tpu.matmul %104, %2, %cst_64 {dimension_numbers = #tpu.dot_dimension_numbers<[1], [0], [0], [1], [0, 0, 1, 1], [], []>} : vector<2x32xf32>, vector<32x32xf32>, vector<2x32xf32> -> vector<2x32xf32>
    %106 = vector.broadcast %4 : vector<1x32xf32> to vector<2x32xf32>
    %107 = arith.addf %105, %106 : vector<2x32xf32>
    %cst_65 = arith.constant dense<0.000000e+00> : vector<2x32xf32>
    %108 = tpu.matmul %100, %1, %cst_65 {dimension_numbers = #tpu.dot_dimension_numbers<[1], [0], [0], [1], [0, 0, 1, 1], [], []>} : vector<2x32xf32>, vector<32x32xf32>, vector<2x32xf32> -> vector<2x32xf32>
    %109 = arith.addf %107, %108 : vector<2x32xf32>
    %110 = math.tanh %109 : vector<2x32xf32>
    %111 = arith.addf %101, %110 : vector<2x32xf32>
    %cst_66 = arith.constant dense<0.000000e+00> : vector<2x32xf32>
    %112 = tpu.matmul %104, %0, %cst_66 {dimension_numbers = #tpu.dot_dimension_numbers<[1], [0], [0], [1], [0, 0, 1, 1], [], []>} : vector<2x32xf32>, vector<32x32xf32>, vector<2x32xf32> -> vector<2x32xf32>
    %113 = arith.addf %39, %112 : vector<2x32xf32>
    %114 = math.tanh %113 : vector<2x32xf32>
    %cst_67 = arith.constant dense<0.000000e+00> : vector<2x32xf32>
    %115 = tpu.matmul %114, %2, %cst_67 {dimension_numbers = #tpu.dot_dimension_numbers<[1], [0], [0], [1], [0, 0, 1, 1], [], []>} : vector<2x32xf32>, vector<32x32xf32>, vector<2x32xf32> -> vector<2x32xf32>
    %116 = vector.broadcast %4 : vector<1x32xf32> to vector<2x32xf32>
    %117 = arith.addf %115, %116 : vector<2x32xf32>
    %cst_68 = arith.constant dense<0.000000e+00> : vector<2x32xf32>
    %118 = tpu.matmul %110, %1, %cst_68 {dimension_numbers = #tpu.dot_dimension_numbers<[1], [0], [0], [1], [0, 0, 1, 1], [], []>} : vector<2x32xf32>, vector<32x32xf32>, vector<2x32xf32> -> vector<2x32xf32>
    %119 = arith.addf %117, %118 : vector<2x32xf32>
    %120 = math.tanh %119 : vector<2x32xf32>
    %121 = arith.addf %111, %120 : vector<2x32xf32>
    %cst_69 = arith.constant dense<0.000000e+00> : vector<2x32xf32>
    %122 = tpu.matmul %114, %0, %cst_69 {dimension_numbers = #tpu.dot_dimension_numbers<[1], [0], [0], [1], [0, 0, 1, 1], [], []>} : vector<2x32xf32>, vector<32x32xf32>, vector<2x32xf32> -> vector<2x32xf32>
    %123 = arith.addf %50, %122 : vector<2x32xf32>
    %124 = math.tanh %123 : vector<2x32xf32>
    %cst_70 = arith.constant dense<0.000000e+00> : vector<2x32xf32>
    %125 = tpu.matmul %124, %2, %cst_70 {dimension_numbers = #tpu.dot_dimension_numbers<[1], [0], [0], [1], [0, 0, 1, 1], [], []>} : vector<2x32xf32>, vector<32x32xf32>, vector<2x32xf32> -> vector<2x32xf32>
    %126 = vector.broadcast %4 : vector<1x32xf32> to vector<2x32xf32>
    %127 = arith.addf %125, %126 : vector<2x32xf32>
    %cst_71 = arith.constant dense<0.000000e+00> : vector<2x32xf32>
    %128 = tpu.matmul %120, %1, %cst_71 {dimension_numbers = #tpu.dot_dimension_numbers<[1], [0], [0], [1], [0, 0, 1, 1], [], []>} : vector<2x32xf32>, vector<32x32xf32>, vector<2x32xf32> -> vector<2x32xf32>
    %129 = arith.addf %127, %128 : vector<2x32xf32>
    %130 = math.tanh %129 : vector<2x32xf32>
    %131 = arith.addf %121, %130 : vector<2x32xf32>
    %cst_72 = arith.constant dense<0.000000e+00> : vector<2x32xf32>
    %132 = tpu.matmul %124, %0, %cst_72 {dimension_numbers = #tpu.dot_dimension_numbers<[1], [0], [0], [1], [0, 0, 1, 1], [], []>} : vector<2x32xf32>, vector<32x32xf32>, vector<2x32xf32> -> vector<2x32xf32>
    %133 = arith.addf %61, %132 : vector<2x32xf32>
    %134 = math.tanh %133 : vector<2x32xf32>
    %cst_73 = arith.constant dense<0.000000e+00> : vector<2x32xf32>
    %135 = tpu.matmul %134, %2, %cst_73 {dimension_numbers = #tpu.dot_dimension_numbers<[1], [0], [0], [1], [0, 0, 1, 1], [], []>} : vector<2x32xf32>, vector<32x32xf32>, vector<2x32xf32> -> vector<2x32xf32>
    %136 = vector.broadcast %4 : vector<1x32xf32> to vector<2x32xf32>
    %137 = arith.addf %135, %136 : vector<2x32xf32>
    %cst_74 = arith.constant dense<0.000000e+00> : vector<2x32xf32>
    %138 = tpu.matmul %130, %1, %cst_74 {dimension_numbers = #tpu.dot_dimension_numbers<[1], [0], [0], [1], [0, 0, 1, 1], [], []>} : vector<2x32xf32>, vector<32x32xf32>, vector<2x32xf32> -> vector<2x32xf32>
    %139 = arith.addf %137, %138 : vector<2x32xf32>
    %140 = math.tanh %139 : vector<2x32xf32>
    %141 = arith.addf %131, %140 : vector<2x32xf32>
    %cst_75 = arith.constant dense<0.000000e+00> : vector<2x32xf32>
    %142 = tpu.matmul %134, %0, %cst_75 {dimension_numbers = #tpu.dot_dimension_numbers<[1], [0], [0], [1], [0, 0, 1, 1], [], []>} : vector<2x32xf32>, vector<32x32xf32>, vector<2x32xf32> -> vector<2x32xf32>
    %143 = arith.addf %72, %142 : vector<2x32xf32>
    %144 = math.tanh %143 : vector<2x32xf32>
    %cst_76 = arith.constant dense<0.000000e+00> : vector<2x32xf32>
    %145 = tpu.matmul %144, %2, %cst_76 {dimension_numbers = #tpu.dot_dimension_numbers<[1], [0], [0], [1], [0, 0, 1, 1], [], []>} : vector<2x32xf32>, vector<32x32xf32>, vector<2x32xf32> -> vector<2x32xf32>
    %146 = vector.broadcast %4 : vector<1x32xf32> to vector<2x32xf32>
    %147 = arith.addf %145, %146 : vector<2x32xf32>
    %cst_77 = arith.constant dense<0.000000e+00> : vector<2x32xf32>
    %148 = tpu.matmul %140, %1, %cst_77 {dimension_numbers = #tpu.dot_dimension_numbers<[1], [0], [0], [1], [0, 0, 1, 1], [], []>} : vector<2x32xf32>, vector<32x32xf32>, vector<2x32xf32> -> vector<2x32xf32>
    %149 = arith.addf %147, %148 : vector<2x32xf32>
    %150 = math.tanh %149 : vector<2x32xf32>
    %151 = arith.addf %141, %150 : vector<2x32xf32>
    %cst_78 = arith.constant dense<0.000000e+00> : vector<2x32xf32>
    %152 = tpu.matmul %144, %0, %cst_78 {dimension_numbers = #tpu.dot_dimension_numbers<[1], [0], [0], [1], [0, 0, 1, 1], [], []>} : vector<2x32xf32>, vector<32x32xf32>, vector<2x32xf32> -> vector<2x32xf32>
    %153 = arith.addf %83, %152 : vector<2x32xf32>
    %154 = math.tanh %153 : vector<2x32xf32>
    %cst_79 = arith.constant dense<0.000000e+00> : vector<2x32xf32>
    %155 = tpu.matmul %154, %2, %cst_79 {dimension_numbers = #tpu.dot_dimension_numbers<[1], [0], [0], [1], [0, 0, 1, 1], [], []>} : vector<2x32xf32>, vector<32x32xf32>, vector<2x32xf32> -> vector<2x32xf32>
    %156 = vector.broadcast %4 : vector<1x32xf32> to vector<2x32xf32>
    %157 = arith.addf %155, %156 : vector<2x32xf32>
    %cst_80 = arith.constant dense<0.000000e+00> : vector<2x32xf32>
    %158 = tpu.matmul %150, %1, %cst_80 {dimension_numbers = #tpu.dot_dimension_numbers<[1], [0], [0], [1], [0, 0, 1, 1], [], []>} : vector<2x32xf32>, vector<32x32xf32>, vector<2x32xf32> -> vector<2x32xf32>
    %159 = arith.addf %157, %158 : vector<2x32xf32>
    %160 = math.tanh %159 : vector<2x32xf32>
    %161 = arith.addf %151, %160 : vector<2x32xf32>
    %cst_81 = arith.constant dense<0.000000e+00> : vector<2x32xf32>
    %162 = tpu.matmul %154, %0, %cst_81 {dimension_numbers = #tpu.dot_dimension_numbers<[1], [0], [0], [1], [0, 0, 1, 1], [], []>} : vector<2x32xf32>, vector<32x32xf32>, vector<2x32xf32> -> vector<2x32xf32>
    %163 = arith.addf %94, %162 : vector<2x32xf32>
    %164 = math.tanh %163 : vector<2x32xf32>
    %cst_82 = arith.constant dense<0.000000e+00> : vector<2x32xf32>
    %165 = tpu.matmul %164, %2, %cst_82 {dimension_numbers = #tpu.dot_dimension_numbers<[1], [0], [0], [1], [0, 0, 1, 1], [], []>} : vector<2x32xf32>, vector<32x32xf32>, vector<2x32xf32> -> vector<2x32xf32>
    %166 = vector.broadcast %4 : vector<1x32xf32> to vector<2x32xf32>
    %167 = arith.addf %165, %166 : vector<2x32xf32>
    %cst_83 = arith.constant dense<0.000000e+00> : vector<2x32xf32>
    %168 = tpu.matmul %160, %1, %cst_83 {dimension_numbers = #tpu.dot_dimension_numbers<[1], [0], [0], [1], [0, 0, 1, 1], [], []>} : vector<2x32xf32>, vector<32x32xf32>, vector<2x32xf32> -> vector<2x32xf32>
    %169 = arith.addf %167, %168 : vector<2x32xf32>
    %170 = math.tanh %169 : vector<2x32xf32>
    %171 = arith.addf %161, %170 : vector<2x32xf32>
    %cst_84 = arith.constant 1.250000e-01 : f32
    %172 = vector.broadcast %cst_84 : f32 to vector<2x32xf32>
    %173 = arith.mulf %171, %172 : vector<2x32xf32>
    %cst_85 = arith.constant dense<0.000000e+00> : vector<2x32xf32>
    %174 = tpu.matmul %173, %5, %cst_85 {dimension_numbers = #tpu.dot_dimension_numbers<[1], [0], [0], [1], [0, 0, 1, 1], [], []>} : vector<2x32xf32>, vector<32x32xf32>, vector<2x32xf32> -> vector<2x32xf32>
    %175 = vector.broadcast %6 : vector<1x32xf32> to vector<2x32xf32>
    %176 = arith.addf %174, %175 : vector<2x32xf32>
    %cst_86 = arith.constant dense<0xFF800000> : vector<2xf32>
    %177 = vector.multi_reduction <maximumf>, %176, %cst_86 [1] : vector<2x32xf32> to vector<2xf32>
    %178 = vector.shape_cast %177 : vector<2xf32> to vector<2x1xf32>
    %179 = vector.broadcast %178 : vector<2x1xf32> to vector<2x32xf32>
    %180 = arith.subf %176, %179 : vector<2x32xf32>
    %181 = math.exp %180 : vector<2x32xf32>
    %cst_87 = arith.constant dense<0.000000e+00> : vector<2xf32>
    %182 = vector.multi_reduction <add>, %181, %cst_87 [1] : vector<2x32xf32> to vector<2xf32>
    %183 = vector.shape_cast %182 : vector<2xf32> to vector<2x1xf32>
    %184 = math.log %183 : vector<2x1xf32>
    %185 = vector.broadcast %184 : vector<2x1xf32> to vector<2x32xf32>
    %186 = arith.subf %180, %185 : vector<2x32xf32>
    %187 = vector.extract_strided_slice %186 {offsets = [0, 0], sizes = [2, 10], strides = [1, 1]} : vector<2x32xf32> to vector<2x10xf32>
    %c0_88 = arith.constant 0 : index
    %c0_89 = arith.constant 0 : index
    %188 = vector.load %arg2[%c0_88, %c0_89] : memref<2x10xf32, #tpu.memory_space<vmem>>, vector<2x10xf32>
    tpu.vector_store %arg2[%c0_88, %c0_89], %187 {strides = array<i32>} : memref<2x10xf32, #tpu.memory_space<vmem>>, vector<2x10xf32>,
    return
  }
}

</mosaic_0001>

<llo_original>
// kernel: tpu_custom_call.1
$region0: #{tpu_custom_call.1}
  #allocation0 [shape = 'u32[]', space=smem, size = 0x4, offset = 0x4, fixed_abs, tag = 'smem constant byte address 0x4 - core index']
  #allocation1 [shape = 'u32[144,128]{1,0:T(1,128)}', space=vmem, size = 0x12000, scoped, tag = 'internal scratch']
  %s0 = inlined_call_operand.vmem [shape: s32[2,8], index: 0, kind: input, shape index: {}]
  %s1 = inlined_call_operand.vmem [shape: f32[168,32], index: 1, kind: input, shape index: {}]
  %s2 = inlined_call_operand.hbm [shape: f32[2,10], index: 2, kind: output, shape index: {}]
  %s3 = sld [smem:[#allocation0]]
  $region22: #{tpu_custom_call.1} parent=0
    _
  %s5 = ssub.s32 1, %s3
  %s6 = scalar_select 0, %s5, %s3
  $region1: #{tpu_custom_call.1} parent=0
    #allocation2 [shape = 'u8[1024]{0}', space=smem, size = 0x400, scoped, tag = 'input window, operand 0, single buffered']
    #allocation3 [shape = 's32[1]{0}', space=sflag, size = 0x4, scoped, tag = 'scoped memory for tpu_custom_call.1']
    #allocation4 [shape = 's32[1]{0}', space=sflag, size = 0x4, scoped, tag = 'scoped memory for tpu_custom_call.1']
    #allocation5 [shape = 'u8[1024]{0}', space=vmem, size = 0x400, scoped, tag = 'output window, operand 0, single buffered']
    %7 = vsyncpa [#allocation4], 0
    %8 = vsyncpa [#allocation3], 0
    // Predicated region
    $region2: #{tpu_custom_call.1} parent=1 // pred_check
      _
    $region3: #{tpu_custom_call.1} parent=1 // pred_check_branch
      %10 = sbr.rel (0) target = $region5
    $region4: #{tpu_custom_call.1} parent=1 // pred_region
      %s12 = ssub.s32 32, 32
      %13 = vsyncadd [#allocation4], %s12
      %s15 = sshll.u32 %s0, 4
      %s16 = int_to_ptr.vmem [resolvable:$true] %s15
      %18 = dma.vmem_to_smem %s16, 32, [#allocation2], [#allocation4]
    $region5: #{tpu_custom_call.1} parent=1 // pred_fallthru
      _
    // Predicated region
    $region6: #{tpu_custom_call.1} parent=1 // pred_check
      _
    $region7: #{tpu_custom_call.1} parent=1 // pred_check_branch
      %20 = sbr.rel (0) target = $region9
    $region8: #{tpu_custom_call.1} parent=1 // pred_region
      _
    $region9: #{tpu_custom_call.1} parent=1 // pred_fallthru
      _
    // Predicated region
    $region10: #{tpu_custom_call.1} parent=1 // pred_check
      _
    $region11: #{tpu_custom_call.1} parent=1 // pred_check_branch
      %22 = sbr.rel (0) target = $region13
    $region12: #{tpu_custom_call.1} parent=1 // pred_region
      %23 = dma.done [#allocation4], 32
    $region13: #{tpu_custom_call.1} parent=1 // pred_fallthru
      _
    %24 = sfence
    %v25 = vld [vmem:[%s1 + $0x10] sm:$0xff]
    %v26 = vld [vmem:[%s1 + $0x18] sm:$0xff]
    %v27 = vld [vmem:[%s1 + $0x20] sm:$0xff]
    %v28 = vld [vmem:[%s1 + $0x28] sm:$0xff]
    %v29 = vld [vmem:[%s1 + $0x38] sm:$0xff]
    %v30 = vld [vmem:[%s1 + $0x40] sm:$0xff]
    %v31 = vld [vmem:[%s1 + $0x48] sm:$0xff]
    %v32 = vld [vmem:[%s1 + $0x50] sm:$0xff]
    %v33 = vld [vmem:[%s1 + $0x58] sm:$0xff]
    %v34 = vld [vmem:[%s1 + $0x60] sm:$0xff]
    %v35 = vld [vmem:[%s1 + $0x68] sm:$0xff]
    %v36 = vld [vmem:[%s1 + $0x70] sm:$0xff]
    %v37 = vld [vmem:[%s1 + $0x30] sm:$0x1]
    %v38 = vld [vmem:[%s1 + $0x78] sm:$0x1]
    %v39 = vld [vmem:[%s1 + $0x80] sm:$0xff]
    %v40 = vld [vmem:[%s1 + $0x88] sm:$0xff]
    %v41 = vld [vmem:[%s1 + $0x90] sm:$0xff]
    %v42 = vld [vmem:[%s1 + $0x98] sm:$0xff]
    %v43 = vld [vmem:[%s1 + $0xa0] sm:$0x1]
    %s44 = sld [smem:[#allocation2]]
    %s45 = scalar_lea.vmem %s1, %s44
    %v46 = vld [vmem:[%s45] sm:$0x1]
    %s47 = sld [smem:[#allocation2 + $0x80]]
    %s48 = scalar_lea.vmem %s1, %s47
    %v49 = vld [vmem:[%s48] sm:$0x1]
    %v51 = vrot.slane %v49, 7
    %vm53 = vcmask 1040384
    %v54 = vsel %vm53, %v46, %v51
    %v55 = vlaneseq
    %v56 = vshrl.u32 %v55, 7
    %v57 = vsub.s32 0, %v56
    %v58 = vrot.slane %v37, %v57
    %v59 = vadd.f32 %v54, %v58
    %s60 = sld [smem:[#allocation2 + $0x1]]
    %s61 = scalar_lea.vmem %s1, %s60
    %v62 = vld [vmem:[%s61] sm:$0x1]
    %s63 = sld [smem:[#allocation2 + $0x81]]
    %s64 = scalar_lea.vmem %s1, %s63
    %v65 = vld [vmem:[%s64] sm:$0x1]
    %v67 = vrot.slane %v65, 7
    %v69 = vsel %vm53, %v62, %v67
    %v70 = vadd.f32 %v69, %v58
    %s71 = sld [smem:[#allocation2 + $0x2]]
    %s72 = scalar_lea.vmem %s1, %s71
    %v73 = vld [vmem:[%s72] sm:$0x1]
    %s74 = sld [smem:[#allocation2 + $0x82]]
    %s75 = scalar_lea.vmem %s1, %s74
    %v76 = vld [vmem:[%s75] sm:$0x1]
    %v78 = vrot.slane %v76, 7
    %v80 = vsel %vm53, %v73, %v78
    %v81 = vadd.f32 %v80, %v58
    %s82 = sld [smem:[#allocation2 + $0x3]]
    %s83 = scalar_lea.vmem %s1, %s82
    %v84 = vld [vmem:[%s83] sm:$0x1]
    %s85 = sld [smem:[#allocation2 + $0x83]]
    %s86 = scalar_lea.vmem %s1, %s85
    %v87 = vld [vmem:[%s86] sm:$0x1]
    %v89 = vrot.slane %v87, 7
    %v91 = vsel %vm53, %v84, %v89
    %v92 = vadd.f32 %v91, %v58
    %s93 = sld [smem:[#allocation2 + $0x4]]
    %s94 = scalar_lea.vmem %s1, %s93
    %v95 = vld [vmem:[%s94] sm:$0x1]
    %s96 = sld [smem:[#allocation2 + $0x84]]
    %s97 = scalar_lea.vmem %s1, %s96
    %v98 = vld [vmem:[%s97] sm:$0x1]
    %v100 = vrot.slane %v98, 7
    %v102 = vsel %vm53, %v95, %v100
    %v103 = vadd.f32 %v102, %v58
    %s104 = sld [smem:[#allocation2 + $0x5]]
    %s105 = scalar_lea.vmem %s1, %s104
    %v106 = vld [vmem:[%s105] sm:$0x1]
    %s107 = sld [smem:[#allocation2 + $0x85]]
    %s108 = scalar_lea.vmem %s1, %s107
    %v109 = vld [vmem:[%s108] sm:$0x1]
    %v111 = vrot.slane %v109, 7
    %v113 = vsel %vm53, %v106, %v111
    %v114 = vadd.f32 %v113, %v58
    %s115 = sld [smem:[#allocation2 + $0x6]]
    %s116 = scalar_lea.vmem %s1, %s115
    %v117 = vld [vmem:[%s116] sm:$0x1]
    %s118 = sld [smem:[#allocation2 + $0x86]]
    %s119 = scalar_lea.vmem %s1, %s118
    %v120 = vld [vmem:[%s119] sm:$0x1]
    %v122 = vrot.slane %v120, 7
    %v124 = vsel %vm53, %v117, %v122
    %v125 = vadd.f32 %v124, %v58
    %s126 = sld [smem:[#allocation2 + $0x7]]
    %s127 = scalar_lea.vmem %s1, %s126
    %v128 = vld [vmem:[%s127] sm:$0x1]
    %s129 = sld [smem:[#allocation2 + $0x87]]
    %s130 = scalar_lea.vmem %s1, %s129
    %v131 = vld [vmem:[%s130] sm:$0x1]
    %v133 = vrot.slane %v131, 7
    %v135 = vsel %vm53, %v128, %v133
    %v136 = vadd.f32 %v135, %v58
    %v137 = vtanh.pop %v59
    %v138 = vlaneseq
    %v139 = vshrl.u32 %v138, 7
    %v140 = vsub.s32 0, %v139
    %v141 = vrot.slane %v38, %v140
    %vm142 = vcmask 261120
    %v144 = vsel %vm142, %v137, 0
    %146 = vmatprep.subr.mxu0 0.0
    %147 = vmatpush1.msra.mxu0 0.0
    %148 = vmatprep.subr.mxu0 0.0
    %149 = vmatpush1.msra.mxu0 0.0
    %150 = vmatprep.subr.mxu0 0.0
    %151 = vmatpush1.msra.mxu0 0.0
    %152 = vmatprep.subr.mxu0 0.0
    %153 = vmatpush1.msra.mxu0 0.0
    %154 = vmatprep.subr.mxu0 0.0
    %155 = vmatpush1.msra.mxu0 0.0
    %156 = vmatprep.subr.mxu0 0.0
    %157 = vmatpush1.msra.mxu0 0.0
    %158 = vmatprep.subr.mxu0 0.0
    %159 = vmatpush1.msra.mxu0 0.0
    %160 = vmatprep.subr.mxu0 0.0
    %161 = vmatpush1.msra.mxu0 0.0
    %162 = vmatprep.subr.mxu0 0.0
    %163 = vmatpush1.msra.mxu0 0.0
    %164 = vmatprep.subr.mxu0 0.0
    %165 = vmatpush1.msra.mxu0 0.0
    %166 = vmatprep.subr.mxu0 0.0
    %167 = vmatpush1.msra.mxu0 0.0
    %168 = vmatprep.subr.mxu0 0.0
    %169 = vmatpush1.msra.mxu0 0.0
    %170 = vmatprep.subr.mxu0 0.0
    %171 = vmatpush1.msra.mxu0 %v36
    %172 = vmatprep.subr.mxu0 0.0
    %173 = vmatpush1.msra.mxu0 %v35
    %174 = vmatprep.subr.mxu0 0.0
    %175 = vmatpush1.msra.mxu0 %v34
    %176 = vmatprep.subr.mxu0 0.0
    %177 = vmatpush1.msra.mxu0 %v33
    %178 = vmatprep.subr.mxu0 0.0
    %179 = vmatpush2.msra.mxu0 0.0
    %180 = vmatprep.subr.mxu0 0.0
    %181 = vmatpush2.msra.mxu0 0.0
    %182 = vmatprep.subr.mxu0 0.0
    %183 = vmatpush2.msra.mxu0 0.0
    %184 = vmatprep.subr.mxu0 0.0
    %185 = vmatpush2.msra.mxu0 0.0
    %186 = vmatprep.subr.mxu0 0.0
    %187 = vmatpush2.msra.mxu0 0.0
    %188 = vmatprep.subr.mxu0 0.0
    %189 = vmatpush2.msra.mxu0 0.0
    %190 = vmatprep.subr.mxu0 0.0
    %191 = vmatpush2.msra.mxu0 0.0
    %192 = vmatprep.subr.mxu0 0.0
    %193 = vmatpush2.msra.mxu0 0.0
    %194 = vmatprep.subr.mxu0 0.0
    %195 = vmatpush2.msra.mxu0 0.0
    %196 = vmatprep.subr.mxu0 0.0
    %197 = vmatpush2.msra.mxu0 0.0
    %198 = vmatprep.subr.mxu0 0.0
    %199 = vmatpush2.msra.mxu0 0.0
    %200 = vmatprep.subr.mxu0 0.0
    %201 = vmatpush2.msra.mxu0 0.0
    %202 = vmatprep.subr.mxu0 0.0
    %203 = vmatpush2.msra.mxu0 0.0
    %204 = vmatprep.subr.mxu0 0.0
    %205 = vmatpush2.msra.mxu0 0.0
    %206 = vmatprep.subr.mxu0 0.0
    %207 = vmatpush2.msra.mxu0 0.0
    %208 = vmatprep.subr.mxu0 0.0
    %209 = vmatpush2.msra.mxu0 0.0
    %210 = vmatprep.mubr.f32.mxu0 0.0
    %211 = vmatmul.mubr.f32.gmra.mxu0 %v144
    %v212 = vpop.f32.mrf.mxu0
    %v213 = vadd.f32 %v141, %v212
    %v214 = vpop.f32.mrf.mxu0
    %215 = vdwg.mxu0
    %v216 = vtanh.pop %v213
    %v217 = vadd.f32 %v216, 0.0
    %218 = vmatprep.subr.mxu0 0.0
    %219 = vmatpush1.msra.mxu0 0.0
    %220 = vmatprep.subr.mxu0 0.0
    %221 = vmatpush1.msra.mxu0 0.0
    %222 = vmatprep.subr.mxu0 0.0
    %223 = vmatpush1.msra.mxu0 0.0
    %224 = vmatprep.subr.mxu0 0.0
    %225 = vmatpush1.msra.mxu0 0.0
    %226 = vmatprep.subr.mxu0 0.0
    %227 = vmatpush1.msra.mxu0 0.0
    %228 = vmatprep.subr.mxu0 0.0
    %229 = vmatpush1.msra.mxu0 0.0
    %230 = vmatprep.subr.mxu0 0.0
    %231 = vmatpush1.msra.mxu0 0.0
    %232 = vmatprep.subr.mxu0 0.0
    %233 = vmatpush1.msra.mxu0 0.0
    %234 = vmatprep.subr.mxu0 0.0
    %235 = vmatpush1.msra.mxu0 0.0
    %236 = vmatprep.subr.mxu0 0.0
    %237 = vmatpush1.msra.mxu0 0.0
    %238 = vmatprep.subr.mxu0 0.0
    %239 = vmatpush1.msra.mxu0 0.0
    %240 = vmatprep.subr.mxu0 0.0
    %241 = vmatpush1.msra.mxu0 0.0
    %242 = vmatprep.subr.mxu0 0.0
    %243 = vmatpush1.msra.mxu0 %v28
    %244 = vmatprep.subr.mxu0 0.0
    %245 = vmatpush1.msra.mxu0 %v27
    %246 = vmatprep.subr.mxu0 0.0
    %247 = vmatpush1.msra.mxu0 %v26
    %248 = vmatprep.subr.mxu0 0.0
    %249 = vmatpush1.msra.mxu0 %v25
    %250 = vmatprep.subr.mxu0 0.0
    %251 = vmatpush2.msra.mxu0 0.0
    %252 = vmatprep.subr.mxu0 0.0
    %253 = vmatpush2.msra.mxu0 0.0
    %254 = vmatprep.subr.mxu0 0.0
    %255 = vmatpush2.msra.mxu0 0.0
    %256 = vmatprep.subr.mxu0 0.0
    %257 = vmatpush2.msra.mxu0 0.0
    %258 = vmatprep.subr.mxu0 0.0
    %259 = vmatpush2.msra.mxu0 0.0
    %260 = vmatprep.subr.mxu0 0.0
    %261 = vmatpush2.msra.mxu0 0.0
    %262 = vmatprep.subr.mxu0 0.0
    %263 = vmatpush2.msra.mxu0 0.0
    %264 = vmatprep.subr.mxu0 0.0
    %265 = vmatpush2.msra.mxu0 0.0
    %266 = vmatprep.subr.mxu0 0.0
    %267 = vmatpush2.msra.mxu0 0.0
    %268 = vmatprep.subr.mxu0 0.0
    %269 = vmatpush2.msra.mxu0 0.0
    %270 = vmatprep.subr.mxu0 0.0
    %271 = vmatpush2.msra.mxu0 0.0
    %272 = vmatprep.subr.mxu0 0.0
    %273 = vmatpush2.msra.mxu0 0.0
    %274 = vmatprep.subr.mxu0 0.0
    %275 = vmatpush2.msra.mxu0 0.0
    %276 = vmatprep.subr.mxu0 0.0
    %277 = vmatpush2.msra.mxu0 0.0
    %278 = vmatprep.subr.mxu0 0.0
    %279 = vmatpush2.msra.mxu0 0.0
    %280 = vmatprep.subr.mxu0 0.0
    %281 = vmatpush2.msra.mxu0 0.0
    %282 = vmatprep.mubr.f32.mxu0 0.0
    %283 = vmatmul.mubr.f32.gmra.mxu0 %v144
    %v284 = vpop.f32.mrf.mxu0
    %v285 = vadd.f32 0.0, %v284
    %v286 = vpop.f32.mrf.mxu0
    %287 = vdwg.mxu0
    %v288 = vadd.f32 %v70, %v285
    %v289 = vtanh.pop %v288
    %v291 = vsel %vm142, %v289, 0
    %293 = vmatprep.subr.mxu0 0.0
    %294 = vmatpush1.msra.mxu0 0.0
    %295 = vmatprep.subr.mxu0 0.0
    %296 = vmatpush1.msra.mxu0 0.0
    %297 = vmatprep.subr.mxu0 0.0
    %298 = vmatpush1.msra.mxu0 0.0
    %299 = vmatprep.subr.mxu0 0.0
    %300 = vmatpush1.msra.mxu0 0.0
    %301 = vmatprep.subr.mxu0 0.0
    %302 = vmatpush1.msra.mxu0 0.0
    %303 = vmatprep.subr.mxu0 0.0
    %304 = vmatpush1.msra.mxu0 0.0
    %305 = vmatprep.subr.mxu0 0.0
    %306 = vmatpush1.msra.mxu0 0.0
    %307 = vmatprep.subr.mxu0 0.0
    %308 = vmatpush1.msra.mxu0 0.0
    %309 = vmatprep.subr.mxu0 0.0
    %310 = vmatpush1.msra.mxu0 0.0
    %311 = vmatprep.subr.mxu0 0.0
    %312 = vmatpush1.msra.mxu0 0.0
    %313 = vmatprep.subr.mxu0 0.0
    %314 = vmatpush1.msra.mxu0 0.0
    %315 = vmatprep.subr.mxu0 0.0
    %316 = vmatpush1.msra.mxu0 0.0
    %317 = vmatprep.subr.mxu0 0.0
    %318 = vmatpush1.msra.mxu0 %v36
    %319 = vmatprep.subr.mxu0 0.0
    %320 = vmatpush1.msra.mxu0 %v35
    %321 = vmatprep.subr.mxu0 0.0
    %322 = vmatpush1.msra.mxu0 %v34
    %323 = vmatprep.subr.mxu0 0.0
    %324 = vmatpush1.msra.mxu0 %v33
    %325 = vmatprep.subr.mxu0 0.0
    %326 = vmatpush2.msra.mxu0 0.0
    %327 = vmatprep.subr.mxu0 0.0
    %328 = vmatpush2.msra.mxu0 0.0
    %329 = vmatprep.subr.mxu0 0.0
    %330 = vmatpush2.msra.mxu0 0.0
    %331 = vmatprep.subr.mxu0 0.0
    %332 = vmatpush2.msra.mxu0 0.0
    %333 = vmatprep.subr.mxu0 0.0
    %334 = vmatpush2.msra.mxu0 0.0
    %335 = vmatprep.subr.mxu0 0.0
    %336 = vmatpush2.msra.mxu0 0.0
    %337 = vmatprep.subr.mxu0 0.0
    %338 = vmatpush2.msra.mxu0 0.0
    %339 = vmatprep.subr.mxu0 0.0
    %340 = vmatpush2.msra.mxu0 0.0
    %341 = vmatprep.subr.mxu0 0.0
    %342 = vmatpush2.msra.mxu0 0.0
    %343 = vmatprep.subr.mxu0 0.0
    %344 = vmatpush2.msra.mxu0 0.0
    %345 = vmatprep.subr.mxu0 0.0
    %346 = vmatpush2.msra.mxu0 0.0
    %347 = vmatprep.subr.mxu0 0.0
    %348 = vmatpush2.msra.mxu0 0.0
    %349 = vmatprep.subr.mxu0 0.0
    %350 = vmatpush2.msra.mxu0 0.0
    %351 = vmatprep.subr.mxu0 0.0
    %352 = vmatpush2.msra.mxu0 0.0
    %353 = vmatprep.subr.mxu0 0.0
    %354 = vmatpush2.msra.mxu0 0.0
    %355 = vmatprep.subr.mxu0 0.0
    %356 = vmatpush2.msra.mxu0 0.0
    %357 = vmatprep.mubr.f32.mxu0 0.0
    %358 = vmatmul.mubr.f32.gmra.mxu0 %v291
    %v359 = vpop.f32.mrf.mxu0
    %v360 = vadd.f32 %v141, %v359
    %v361 = vpop.f32.mrf.mxu0
    %362 = vdwg.mxu0
    %v364 = vsel %vm142, %v216, 0
    %366 = vmatprep.subr.mxu0 0.0
    %367 = vmatpush1.msra.mxu0 0.0
    %368 = vmatprep.subr.mxu0 0.0
    %369 = vmatpush1.msra.mxu0 0.0
    %370 = vmatprep.subr.mxu0 0.0
    %371 = vmatpush1.msra.mxu0 0.0
    %372 = vmatprep.subr.mxu0 0.0
    %373 = vmatpush1.msra.mxu0 0.0
    %374 = vmatprep.subr.mxu0 0.0
    %375 = vmatpush1.msra.mxu0 0.0
    %376 = vmatprep.subr.mxu0 0.0
    %377 = vmatpush1.msra.mxu0 0.0
    %378 = vmatprep.subr.mxu0 0.0
    %379 = vmatpush1.msra.mxu0 0.0
    %380 = vmatprep.subr.mxu0 0.0
    %381 = vmatpush1.msra.mxu0 0.0
    %382 = vmatprep.subr.mxu0 0.0
    %383 = vmatpush1.msra.mxu0 0.0
    %384 = vmatprep.subr.mxu0 0.0
    %385 = vmatpush1.msra.mxu0 0.0
    %386 = vmatprep.subr.mxu0 0.0
    %387 = vmatpush1.msra.mxu0 0.0
    %388 = vmatprep.subr.mxu0 0.0
    %389 = vmatpush1.msra.mxu0 0.0
    %390 = vmatprep.subr.mxu0 0.0
    %391 = vmatpush1.msra.mxu0 %v32
    %392 = vmatprep.subr.mxu0 0.0
    %393 = vmatpush1.msra.mxu0 %v31
    %394 = vmatprep.subr.mxu0 0.0
    %395 = vmatpush1.msra.mxu0 %v30
    %396 = vmatprep.subr.mxu0 0.0
    %397 = vmatpush1.msra.mxu0 %v29
    %398 = vmatprep.subr.mxu0 0.0
    %399 = vmatpush2.msra.mxu0 0.0
    %400 = vmatprep.subr.mxu0 0.0
    %401 = vmatpush2.msra.mxu0 0.0
    %402 = vmatprep.subr.mxu0 0.0
    %403 = vmatpush2.msra.mxu0 0.0
    %404 = vmatprep.subr.mxu0 0.0
    %405 = vmatpush2.msra.mxu0 0.0
    %406 = vmatprep.subr.mxu0 0.0
    %407 = vmatpush2.msra.mxu0 0.0
    %408 = vmatprep.subr.mxu0 0.0
    %409 = vmatpush2.msra.mxu0 0.0
    %410 = vmatprep.subr.mxu0 0.0
    %411 = vmatpush2.msra.mxu0 0.0
    %412 = vmatprep.subr.mxu0 0.0
    %413 = vmatpush2.msra.mxu0 0.0
    %414 = vmatprep.subr.mxu0 0.0
    %415 = vmatpush2.msra.mxu0 0.0
    %416 = vmatprep.subr.mxu0 0.0
    %417 = vmatpush2.msra.mxu0 0.0
    %418 = vmatprep.subr.mxu0 0.0
    %419 = vmatpush2.msra.mxu0 0.0
    %420 = vmatprep.subr.mxu0 0.0
    %421 = vmatpush2.msra.mxu0 0.0
    %422 = vmatprep.subr.mxu0 0.0
    %423 = vmatpush2.msra.mxu0 0.0
    %424 = vmatprep.subr.mxu0 0.0
    %425 = vmatpush2.msra.mxu0 0.0
    %426 = vmatprep.subr.mxu0 0.0
    %427 = vmatpush2.msra.mxu0 0.0
    %428 = vmatprep.subr.mxu0 0.0
    %429 = vmatpush2.msra.mxu0 0.0
    %430 = vmatprep.mubr.f32.mxu0 0.0
    %431 = vmatmul.mubr.f32.gmra.mxu0 %v364
    %v432 = vpop.f32.mrf.mxu0
    %v433 = vadd.f32 0.0, %v432
    %v434 = vpop.f32.mrf.mxu0
    %435 = vdwg.mxu0
    %v436 = vadd.f32 %v360, %v433
    %v437 = vtanh.pop %v436
    %v438 = vadd.f32 %v217, %v437
    %439 = vmatprep.subr.mxu0 0.0
    %440 = vmatpush1.msra.mxu0 0.0
    %441 = vmatprep.subr.mxu0 0.0
    %442 = vmatpush1.msra.mxu0 0.0
    %443 = vmatprep.subr.mxu0 0.0
    %444 = vmatpush1.msra.mxu0 0.0
    %445 = vmatprep.subr.mxu0 0.0
    %446 = vmatpush1.msra.mxu0 0.0
    %447 = vmatprep.subr.mxu0 0.0
    %448 = vmatpush1.msra.mxu0 0.0
    %449 = vmatprep.subr.mxu0 0.0
    %450 = vmatpush1.msra.mxu0 0.0
    %451 = vmatprep.subr.mxu0 0.0
    %452 = vmatpush1.msra.mxu0 0.0
    %453 = vmatprep.subr.mxu0 0.0
    %454 = vmatpush1.msra.mxu0 0.0
    %455 = vmatprep.subr.mxu0 0.0
    %456 = vmatpush1.msra.mxu0 0.0
    %457 = vmatprep.subr.mxu0 0.0
    %458 = vmatpush1.msra.mxu0 0.0
    %459 = vmatprep.subr.mxu0 0.0
    %460 = vmatpush1.msra.mxu0 0.0
    %461 = vmatprep.subr.mxu0 0.0
    %462 = vmatpush1.msra.mxu0 0.0
    %463 = vmatprep.subr.mxu0 0.0
    %464 = vmatpush1.msra.mxu0 %v28
    %465 = vmatprep.subr.mxu0 0.0
    %466 = vmatpush1.msra.mxu0 %v27
    %467 = vmatprep.subr.mxu0 0.0
    %468 = vmatpush1.msra.mxu0 %v26
    %469 = vmatprep.subr.mxu0 0.0
    %470 = vmatpush1.msra.mxu0 %v25
    %471 = vmatprep.subr.mxu0 0.0
    %472 = vmatpush2.msra.mxu0 0.0
    %473 = vmatprep.subr.mxu0 0.0
    %474 = vmatpush2.msra.mxu0 0.0
    %475 = vmatprep.subr.mxu0 0.0
    %476 = vmatpush2.msra.mxu0 0.0
    %477 = vmatprep.subr.mxu0 0.0
    %478 = vmatpush2.msra.mxu0 0.0
    %479 = vmatprep.subr.mxu0 0.0
    %480 = vmatpush2.msra.mxu0 0.0
    %481 = vmatprep.subr.mxu0 0.0
    %482 = vmatpush2.msra.mxu0 0.0
    %483 = vmatprep.subr.mxu0 0.0
    %484 = vmatpush2.msra.mxu0 0.0
    %485 = vmatprep.subr.mxu0 0.0
    %486 = vmatpush2.msra.mxu0 0.0
    %487 = vmatprep.subr.mxu0 0.0
    %488 = vmatpush2.msra.mxu0 0.0
    %489 = vmatprep.subr.mxu0 0.0
    %490 = vmatpush2.msra.mxu0 0.0
    %491 = vmatprep.subr.mxu0 0.0
    %492 = vmatpush2.msra.mxu0 0.0
    %493 = vmatprep.subr.mxu0 0.0
    %494 = vmatpush2.msra.mxu0 0.0
    %495 = vmatprep.subr.mxu0 0.0
    %496 = vmatpush2.msra.mxu0 0.0
    %497 = vmatprep.subr.mxu0 0.0
    %498 = vmatpush2.msra.mxu0 0.0
    %499 = vmatprep.subr.mxu0 0.0
    %500 = vmatpush2.msra.mxu0 0.0
    %501 = vmatprep.subr.mxu0 0.0
    %502 = vmatpush2.msra.mxu0 0.0
    %503 = vmatprep.mubr.f32.mxu0 0.0
    %504 = vmatmul.mubr.f32.gmra.mxu0 %v291
    %v505 = vpop.f32.mrf.mxu0
    %v506 = vadd.f32 0.0, %v505
    %v507 = vpop.f32.mrf.mxu0
    %508 = vdwg.mxu0
    %v509 = vadd.f32 %v81, %v506
    %v510 = vtanh.pop %v509
    %v512 = vsel %vm142, %v510, 0
    %514 = vmatprep.subr.mxu0 0.0
    %515 = vmatpush1.msra.mxu0 0.0
    %516 = vmatprep.subr.mxu0 0.0
    %517 = vmatpush1.msra.mxu0 0.0
    %518 = vmatprep.subr.mxu0 0.0
    %519 = vmatpush1.msra.mxu0 0.0
    %520 = vmatprep.subr.mxu0 0.0
    %521 = vmatpush1.msra.mxu0 0.0
    %522 = vmatprep.subr.mxu0 0.0
    %523 = vmatpush1.msra.mxu0 0.0
    %524 = vmatprep.subr.mxu0 0.0
    %525 = vmatpush1.msra.mxu0 0.0
    %526 = vmatprep.subr.mxu0 0.0
    %527 = vmatpush1.msra.mxu0 0.0
    %528 = vmatprep.subr.mxu0 0.0
    %529 = vmatpush1.msra.mxu0 0.0
    %530 = vmatprep.subr.mxu0 0.0
    %531 = vmatpush1.msra.mxu0 0.0
    %532 = vmatprep.subr.mxu0 0.0
    %533 = vmatpush1.msra.mxu0 0.0
    %534 = vmatprep.subr.mxu0 0.0
    %535 = vmatpush1.msra.mxu0 0.0
    %536 = vmatprep.subr.mxu0 0.0
    %537 = vmatpush1.msra.mxu0 0.0
    %538 = vmatprep.subr.mxu0 0.0
    %539 = vmatpush1.msra.mxu0 %v36
    %540 = vmatprep.subr.mxu0 0.0
    %541 = vmatpush1.msra.mxu0 %v35
    %542 = vmatprep.subr.mxu0 0.0
    %543 = vmatpush1.msra.mxu0 %v34
    %544 = vmatprep.subr.mxu0 0.0
    %545 = vmatpush1.msra.mxu0 %v33
    %546 = vmatprep.subr.mxu0 0.0
    %547 = vmatpush2.msra.mxu0 0.0
    %548 = vmatprep.subr.mxu0 0.0
    %549 = vmatpush2.msra.mxu0 0.0
    %550 = vmatprep.subr.mxu0 0.0
    %551 = vmatpush2.msra.mxu0 0.0
    %552 = vmatprep.subr.mxu0 0.0
    %553 = vmatpush2.msra.mxu0 0.0
    %554 = vmatprep.subr.mxu0 0.0
    %555 = vmatpush2.msra.mxu0 0.0
    %556 = vmatprep.subr.mxu0 0.0
    %557 = vmatpush2.msra.mxu0 0.0
    %558 = vmatprep.subr.mxu0 0.0
    %559 = vmatpush2.msra.mxu0 0.0
    %560 = vmatprep.subr.mxu0 0.0
    %561 = vmatpush2.msra.mxu0 0.0
    %562 = vmatprep.subr.mxu0 0.0
    %563 = vmatpush2.msra.mxu0 0.0
    %564 = vmatprep.subr.mxu0 0.0
    %565 = vmatpush2.msra.mxu0 0.0
    %566 = vmatprep.subr.mxu0 0.0
    %567 = vmatpush2.msra.mxu0 0.0
    %568 = vmatprep.subr.mxu0 0.0
    %569 = vmatpush2.msra.mxu0 0.0
    %570 = vmatprep.subr.mxu0 0.0
    %571 = vmatpush2.msra.mxu0 0.0
    %572 = vmatprep.subr.mxu0 0.0
    %573 = vmatpush2.msra.mxu0 0.0
    %574 = vmatprep.subr.mxu0 0.0
    %575 = vmatpush2.msra.mxu0 0.0
    %576 = vmatprep.subr.mxu0 0.0
    %577 = vmatpush2.msra.mxu0 0.0
    %578 = vmatprep.mubr.f32.mxu0 0.0
    %579 = vmatmul.mubr.f32.gmra.mxu0 %v512
    %v580 = vpop.f32.mrf.mxu0
    %v581 = vadd.f32 %v141, %v580
    %v582 = vpop.f32.mrf.mxu0
    %583 = vdwg.mxu0
    %v585 = vsel %vm142, %v437, 0
    %587 = vmatprep.subr.mxu0 0.0
    %588 = vmatpush1.msra.mxu0 0.0
    %589 = vmatprep.subr.mxu0 0.0
    %590 = vmatpush1.msra.mxu0 0.0
    %591 = vmatprep.subr.mxu0 0.0
    %592 = vmatpush1.msra.mxu0 0.0
    %593 = vmatprep.subr.mxu0 0.0
    %594 = vmatpush1.msra.mxu0 0.0
    %595 = vmatprep.subr.mxu0 0.0
    %596 = vmatpush1.msra.mxu0 0.0
    %597 = vmatprep.subr.mxu0 0.0
    %598 = vmatpush1.msra.mxu0 0.0
    %599 = vmatprep.subr.mxu0 0.0
    %600 = vmatpush1.msra.mxu0 0.0
    %601 = vmatprep.subr.mxu0 0.0
    %602 = vmatpush1.msra.mxu0 0.0
    %603 = vmatprep.subr.mxu0 0.0
    %604 = vmatpush1.msra.mxu0 0.0
    %605 = vmatprep.subr.mxu0 0.0
    %606 = vmatpush1.msra.mxu0 0.0
    %607 = vmatprep.subr.mxu0 0.0
    %608 = vmatpush1.msra.mxu0 0.0
    %609 = vmatprep.subr.mxu0 0.0
    %610 = vmatpush1.msra.mxu0 0.0
    %611 = vmatprep.subr.mxu0 0.0
    %612 = vmatpush1.msra.mxu0 %v32
    %613 = vmatprep.subr.mxu0 0.0
    %614 = vmatpush1.msra.mxu0 %v31
    %615 = vmatprep.subr.mxu0 0.0
    %616 = vmatpush1.msra.mxu0 %v30
    %617 = vmatprep.subr.mxu0 0.0
    %618 = vmatpush1.msra.mxu0 %v29
    %619 = vmatprep.subr.mxu0 0.0
    %620 = vmatpush2.msra.mxu0 0.0
    %621 = vmatprep.subr.mxu0 0.0
    %622 = vmatpush2.msra.mxu0 0.0
    %623 = vmatprep.subr.mxu0 0.0
    %624 = vmatpush2.msra.mxu0 0.0
    %625 = vmatprep.subr.mxu0 0.0
    %626 = vmatpush2.msra.mxu0 0.0
    %627 = vmatprep.subr.mxu0 0.0
    %628 = vmatpush2.msra.mxu0 0.0
    %629 = vmatprep.subr.mxu0 0.0
    %630 = vmatpush2.msra.mxu0 0.0
    %631 = vmatprep.subr.mxu0 0.0
    %632 = vmatpush2.msra.mxu0 0.0
    %633 = vmatprep.subr.mxu0 0.0
    %634 = vmatpush2.msra.mxu0 0.0
    %635 = vmatprep.subr.mxu0 0.0
    %636 = vmatpush2.msra.mxu0 0.0
    %637 = vmatprep.subr.mxu0 0.0
    %638 = vmatpush2.msra.mxu0 0.0
    %639 = vmatprep.subr.mxu0 0.0
    %640 = vmatpush2.msra.mxu0 0.0
    %641 = vmatprep.subr.mxu0 0.0
    %642 = vmatpush2.msra.mxu0 0.0
    %643 = vmatprep.subr.mxu0 0.0
    %644 = vmatpush2.msra.mxu0 0.0
    %645 = vmatprep.subr.mxu0 0.0
    %646 = vmatpush2.msra.mxu0 0.0
    %647 = vmatprep.subr.mxu0 0.0
    %648 = vmatpush2.msra.mxu0 0.0
    %649 = vmatprep.subr.mxu0 0.0
    %650 = vmatpush2.msra.mxu0 0.0
    %651 = vmatprep.mubr.f32.mxu0 0.0
    %652 = vmatmul.mubr.f32.gmra.mxu0 %v585
    %v653 = vpop.f32.mrf.mxu0
    %v654 = vadd.f32 0.0, %v653
    %v655 = vpop.f32.mrf.mxu0
    %656 = vdwg.mxu0
    %v657 = vadd.f32 %v581, %v654
    %v658 = vtanh.pop %v657
    %v659 = vadd.f32 %v438, %v658
    %660 = vmatprep.subr.mxu0 0.0
    %661 = vmatpush1.msra.mxu0 0.0
    %662 = vmatprep.subr.mxu0 0.0
    %663 = vmatpush1.msra.mxu0 0.0
    %664 = vmatprep.subr.mxu0 0.0
    %665 = vmatpush1.msra.mxu0 0.0
    %666 = vmatprep.subr.mxu0 0.0
    %667 = vmatpush1.msra.mxu0 0.0
    %668 = vmatprep.subr.mxu0 0.0
    %669 = vmatpush1.msra.mxu0 0.0
    %670 = vmatprep.subr.mxu0 0.0
    %671 = vmatpush1.msra.mxu0 0.0
    %672 = vmatprep.subr.mxu0 0.0
    %673 = vmatpush1.msra.mxu0 0.0
    %674 = vmatprep.subr.mxu0 0.0
    %675 = vmatpush1.msra.mxu0 0.0
    %676 = vmatprep.subr.mxu0 0.0
    %677 = vmatpush1.msra.mxu0 0.0
    %678 = vmatprep.subr.mxu0 0.0
    %679 = vmatpush1.msra.mxu0 0.0
    %680 = vmatprep.subr.mxu0 0.0
    %681 = vmatpush1.msra.mxu0 0.0
    %682 = vmatprep.subr.mxu0 0.0
    %683 = vmatpush1.msra.mxu0 0.0
    %684 = vmatprep.subr.mxu0 0.0
    %685 = vmatpush1.msra.mxu0 %v28
    %686 = vmatprep.subr.mxu0 0.0
    %687 = vmatpush1.msra.mxu0 %v27
    %688 = vmatprep.subr.mxu0 0.0
    %689 = vmatpush1.msra.mxu0 %v26
    %690 = vmatprep.subr.mxu0 0.0
    %691 = vmatpush1.msra.mxu0 %v25
    %692 = vmatprep.subr.mxu0 0.0
    %693 = vmatpush2.msra.mxu0 0.0
    %694 = vmatprep.subr.mxu0 0.0
    %695 = vmatpush2.msra.mxu0 0.0
    %696 = vmatprep.subr.mxu0 0.0
    %697 = vmatpush2.msra.mxu0 0.0
    %698 = vmatprep.subr.mxu0 0.0
    %699 = vmatpush2.msra.mxu0 0.0
    %700 = vmatprep.subr.mxu0 0.0
    %701 = vmatpush2.msra.mxu0 0.0
    %702 = vmatprep.subr.mxu0 0.0
    %703 = vmatpush2.msra.mxu0 0.0
    %704 = vmatprep.subr.mxu0 0.0
    %705 = vmatpush2.msra.mxu0 0.0
    %706 = vmatprep.subr.mxu0 0.0
    %707 = vmatpush2.msra.mxu0 0.0
    %708 = vmatprep.subr.mxu0 0.0
    %709 = vmatpush2.msra.mxu0 0.0
    %710 = vmatprep.subr.mxu0 0.0
    %711 = vmatpush2.msra.mxu0 0.0
    %712 = vmatprep.subr.mxu0 0.0
    %713 = vmatpush2.msra.mxu0 0.0
    %714 = vmatprep.subr.mxu0 0.0
    %715 = vmatpush2.msra.mxu0 0.0
    %716 = vmatprep.subr.mxu0 0.0
    %717 = vmatpush2.msra.mxu0 0.0
    %718 = vmatprep.subr.mxu0 0.0
    %719 = vmatpush2.msra.mxu0 0.0
    %720 = vmatprep.subr.mxu0 0.0
    %721 = vmatpush2.msra.mxu0 0.0
    %722 = vmatprep.subr.mxu0 0.0
    %723 = vmatpush2.msra.mxu0 0.0
    %724 = vmatprep.mubr.f32.mxu0 0.0
    %725 = vmatmul.mubr.f32.gmra.mxu0 %v512
    %v726 = vpop.f32.mrf.mxu0
    %v727 = vadd.f32 0.0, %v726
    %v728 = vpop.f32.mrf.mxu0
    %729 = vdwg.mxu0
    %v730 = vadd.f32 %v92, %v727
    %v731 = vtanh.pop %v730
    %v733 = vsel %vm142, %v731, 0
    %735 = vmatprep.subr.mxu0 0.0
    %736 = vmatpush1.msra.mxu0 0.0
    %737 = vmatprep.subr.mxu0 0.0
    %738 = vmatpush1.msra.mxu0 0.0
    %739 = vmatprep.subr.mxu0 0.0
    %740 = vmatpush1.msra.mxu0 0.0
    %741 = vmatprep.subr.mxu0 0.0
    %742 = vmatpush1.msra.mxu0 0.0
    %743 = vmatprep.subr.mxu0 0.0
    %744 = vmatpush1.msra.mxu0 0.0
    %745 = vmatprep.subr.mxu0 0.0
    %746 = vmatpush1.msra.mxu0 0.0
    %747 = vmatprep.subr.mxu0 0.0
    %748 = vmatpush1.msra.mxu0 0.0
    %749 = vmatprep.subr.mxu0 0.0
    %750 = vmatpush1.msra.mxu0 0.0
    %751 = vmatprep.subr.mxu0 0.0
    %752 = vmatpush1.msra.mxu0 0.0
    %753 = vmatprep.subr.mxu0 0.0
    %754 = vmatpush1.msra.mxu0 0.0
    %755 = vmatprep.subr.mxu0 0.0
    %756 = vmatpush1.msra.mxu0 0.0
    %757 = vmatprep.subr.mxu0 0.0
    %758 = vmatpush1.msra.mxu0 0.0
    %759 = vmatprep.subr.mxu0 0.0
    %760 = vmatpush1.msra.mxu0 %v36
    %761 = vmatprep.subr.mxu0 0.0
    %762 = vmatpush1.msra.mxu0 %v35
    %763 = vmatprep.subr.mxu0 0.0
    %764 = vmatpush1.msra.mxu0 %v34
    %765 = vmatprep.subr.mxu0 0.0
    %766 = vmatpush1.msra.mxu0 %v33
    %767 = vmatprep.subr.mxu0 0.0
    %768 = vmatpush2.msra.mxu0 0.0
    %769 = vmatprep.subr.mxu0 0.0
    %770 = vmatpush2.msra.mxu0 0.0
    %771 = vmatprep.subr.mxu0 0.0
    %772 = vmatpush2.msra.mxu0 0.0
    %773 = vmatprep.subr.mxu0 0.0
    %774 = vmatpush2.msra.mxu0 0.0
    %775 = vmatprep.subr.mxu0 0.0
    %776 = vmatpush2.msra.mxu0 0.0
    %777 = vmatprep.subr.mxu0 0.0
    %778 = vmatpush2.msra.mxu0 0.0
    %779 = vmatprep.subr.mxu0 0.0
    %780 = vmatpush2.msra.mxu0 0.0
    %781 = vmatprep.subr.mxu0 0.0
    %782 = vmatpush2.msra.mxu0 0.0
    %783 = vmatprep.subr.mxu0 0.0
    %784 = vmatpush2.msra.mxu0 0.0
    %785 = vmatprep.subr.mxu0 0.0
    %786 = vmatpush2.msra.mxu0 0.0
    %787 = vmatprep.subr.mxu0 0.0
    %788 = vmatpush2.msra.mxu0 0.0
    %789 = vmatprep.subr.mxu0 0.0
    %790 = vmatpush2.msra.mxu0 0.0
    %791 = vmatprep.subr.mxu0 0.0
    %792 = vmatpush2.msra.mxu0 0.0
    %793 = vmatprep.subr.mxu0 0.0
    %794 = vmatpush2.msra.mxu0 0.0
    %795 = vmatprep.subr.mxu0 0.0
    %796 = vmatpush2.msra.mxu0 0.0
    %797 = vmatprep.subr.mxu0 0.0
    %798 = vmatpush2.msra.mxu0 0.0
    %799 = vmatprep.mubr.f32.mxu0 0.0
    %800 = vmatmul.mubr.f32.gmra.mxu0 %v733
    %v801 = vpop.f32.mrf.mxu0
    %v802 = vadd.f32 %v141, %v801
    %v803 = vpop.f32.mrf.mxu0
    %804 = vdwg.mxu0
    %v806 = vsel %vm142, %v658, 0
    %808 = vmatprep.subr.mxu0 0.0
    %809 = vmatpush1.msra.mxu0 0.0
    %810 = vmatprep.subr.mxu0 0.0
    %811 = vmatpush1.msra.mxu0 0.0
    %812 = vmatprep.subr.mxu0 0.0
    %813 = vmatpush1.msra.mxu0 0.0
    %814 = vmatprep.subr.mxu0 0.0
    %815 = vmatpush1.msra.mxu0 0.0
    %816 = vmatprep.subr.mxu0 0.0
    %817 = vmatpush1.msra.mxu0 0.0
    %818 = vmatprep.subr.mxu0 0.0
    %819 = vmatpush1.msra.mxu0 0.0
    %820 = vmatprep.subr.mxu0 0.0
    %821 = vmatpush1.msra.mxu0 0.0
    %822 = vmatprep.subr.mxu0 0.0
    %823 = vmatpush1.msra.mxu0 0.0
    %824 = vmatprep.subr.mxu0 0.0
    %825 = vmatpush1.msra.mxu0 0.0
    %826 = vmatprep.subr.mxu0 0.0
    %827 = vmatpush1.msra.mxu0 0.0
    %828 = vmatprep.subr.mxu0 0.0
    %829 = vmatpush1.msra.mxu0 0.0
    %830 = vmatprep.subr.mxu0 0.0
    %831 = vmatpush1.msra.mxu0 0.0
    %832 = vmatprep.subr.mxu0 0.0
    %833 = vmatpush1.msra.mxu0 %v32
    %834 = vmatprep.subr.mxu0 0.0
    %835 = vmatpush1.msra.mxu0 %v31
    %836 = vmatprep.subr.mxu0 0.0
    %837 = vmatpush1.msra.mxu0 %v30
    %838 = vmatprep.subr.mxu0 0.0
    %839 = vmatpush1.msra.mxu0 %v29
    %840 = vmatprep.subr.mxu0 0.0
    %841 = vmatpush2.msra.mxu0 0.0
    %842 = vmatprep.subr.mxu0 0.0
    %843 = vmatpush2.msra.mxu0 0.0
    %844 = vmatprep.subr.mxu0 0.0
    %845 = vmatpush2.msra.mxu0 0.0
    %846 = vmatprep.subr.mxu0 0.0
    %847 = vmatpush2.msra.mxu0 0.0
    %848 = vmatprep.subr.mxu0 0.0
    %849 = vmatpush2.msra.mxu0 0.0
    %850 = vmatprep.subr.mxu0 0.0
    %851 = vmatpush2.msra.mxu0 0.0
    %852 = vmatprep.subr.mxu0 0.0
    %853 = vmatpush2.msra.mxu0 0.0
    %854 = vmatprep.subr.mxu0 0.0
    %855 = vmatpush2.msra.mxu0 0.0
    %856 = vmatprep.subr.mxu0 0.0
    %857 = vmatpush2.msra.mxu0 0.0
    %858 = vmatprep.subr.mxu0 0.0
    %859 = vmatpush2.msra.mxu0 0.0
    %860 = vmatprep.subr.mxu0 0.0
    %861 = vmatpush2.msra.mxu0 0.0
    %862 = vmatprep.subr.mxu0 0.0
    %863 = vmatpush2.msra.mxu0 0.0
    %864 = vmatprep.subr.mxu0 0.0
    %865 = vmatpush2.msra.mxu0 0.0
    %866 = vmatprep.subr.mxu0 0.0
    %867 = vmatpush2.msra.mxu0 0.0
    %868 = vmatprep.subr.mxu0 0.0
    %869 = vmatpush2.msra.mxu0 0.0
    %870 = vmatprep.subr.mxu0 0.0
    %871 = vmatpush2.msra.mxu0 0.0
    %872 = vmatprep.mubr.f32.mxu0 0.0
    %873 = vmatmul.mubr.f32.gmra.mxu0 %v806
    %v874 = vpop.f32.mrf.mxu0
    %v875 = vadd.f32 0.0, %v874
    %v876 = vpop.f32.mrf.mxu0
    %877 = vdwg.mxu0
    %v878 = vadd.f32 %v802, %v875
    %v879 = vtanh.pop %v878
    %v880 = vadd.f32 %v659, %v879
    %881 = vmatprep.subr.mxu0 0.0
    %882 = vmatpush1.msra.mxu0 0.0
    %883 = vmatprep.subr.mxu0 0.0
    %884 = vmatpush1.msra.mxu0 0.0
    %885 = vmatprep.subr.mxu0 0.0
    %886 = vmatpush1.msra.mxu0 0.0
    %887 = vmatprep.subr.mxu0 0.0
    %888 = vmatpush1.msra.mxu0 0.0
    %889 = vmatprep.subr.mxu0 0.0
    %890 = vmatpush1.msra.mxu0 0.0
    %891 = vmatprep.subr.mxu0 0.0
    %892 = vmatpush1.msra.mxu0 0.0
    %893 = vmatprep.subr.mxu0 0.0
    %894 = vmatpush1.msra.mxu0 0.0
    %895 = vmatprep.subr.mxu0 0.0
    %896 = vmatpush1.msra.mxu0 0.0
    %897 = vmatprep.subr.mxu0 0.0
    %898 = vmatpush1.msra.mxu0 0.0
    %899 = vmatprep.subr.mxu0 0.0
    %900 = vmatpush1.msra.mxu0 0.0
    %901 = vmatprep.subr.mxu0 0.0
    %902 = vmatpush1.msra.mxu0 0.0
    %903 = vmatprep.subr.mxu0 0.0
    %904 = vmatpush1.msra.mxu0 0.0
    %905 = vmatprep.subr.mxu0 0.0
    %906 = vmatpush1.msra.mxu0 %v28
    %907 = vmatprep.subr.mxu0 0.0
    %908 = vmatpush1.msra.mxu0 %v27
    %909 = vmatprep.subr.mxu0 0.0
    %910 = vmatpush1.msra.mxu0 %v26
    %911 = vmatprep.subr.mxu0 0.0
    %912 = vmatpush1.msra.mxu0 %v25
    %913 = vmatprep.subr.mxu0 0.0
    %914 = vmatpush2.msra.mxu0 0.0
    %915 = vmatprep.subr.mxu0 0.0
    %916 = vmatpush2.msra.mxu0 0.0
    %917 = vmatprep.subr.mxu0 0.0
    %918 = vmatpush2.msra.mxu0 0.0
    %919 = vmatprep.subr.mxu0 0.0
    %920 = vmatpush2.msra.mxu0 0.0
    %921 = vmatprep.subr.mxu0 0.0
    %922 = vmatpush2.msra.mxu0 0.0
    %923 = vmatprep.subr.mxu0 0.0
    %924 = vmatpush2.msra.mxu0 0.0
    %925 = vmatprep.subr.mxu0 0.0
    %926 = vmatpush2.msra.mxu0 0.0
    %927 = vmatprep.subr.mxu0 0.0
    %928 = vmatpush2.msra.mxu0 0.0
    %929 = vmatprep.subr.mxu0 0.0
    %930 = vmatpush2.msra.mxu0 0.0
    %931 = vmatprep.subr.mxu0 0.0
    %932 = vmatpush2.msra.mxu0 0.0
    %933 = vmatprep.subr.mxu0 0.0
    %934 = vmatpush2.msra.mxu0 0.0
    %935 = vmatprep.subr.mxu0 0.0
    %936 = vmatpush2.msra.mxu0 0.0
    %937 = vmatprep.subr.mxu0 0.0
    %938 = vmatpush2.msra.mxu0 0.0
    %939 = vmatprep.subr.mxu0 0.0
    %940 = vmatpush2.msra.mxu0 0.0
    %941 = vmatprep.subr.mxu0 0.0
    %942 = vmatpush2.msra.mxu0 0.0
    %943 = vmatprep.subr.mxu0 0.0
    %944 = vmatpush2.msra.mxu0 0.0
    %945 = vmatprep.mubr.f32.mxu0 0.0
    %946 = vmatmul.mubr.f32.gmra.mxu0 %v733
    %v947 = vpop.f32.mrf.mxu0
    %v948 = vadd.f32 0.0, %v947
    %v949 = vpop.f32.mrf.mxu0
    %950 = vdwg.mxu0
    %v951 = vadd.f32 %v103, %v948
    %v952 = vtanh.pop %v951
    %v954 = vsel %vm142, %v952, 0
    %956 = vmatprep.subr.mxu0 0.0
    %957 = vmatpush1.msra.mxu0 0.0
    %958 = vmatprep.subr.mxu0 0.0
    %959 = vmatpush1.msra.mxu0 0.0
    %960 = vmatprep.subr.mxu0 0.0
    %961 = vmatpush1.msra.mxu0 0.0
    %962 = vmatprep.subr.mxu0 0.0
    %963 = vmatpush1.msra.mxu0 0.0
    %964 = vmatprep.subr.mxu0 0.0
    %965 = vmatpush1.msra.mxu0 0.0
    %966 = vmatprep.subr.mxu0 0.0
    %967 = vmatpush1.msra.mxu0 0.0
    %968 = vmatprep.subr.mxu0 0.0
    %969 = vmatpush1.msra.mxu0 0.0
    %970 = vmatprep.subr.mxu0 0.0
    %971 = vmatpush1.msra.mxu0 0.0
    %972 = vmatprep.subr.mxu0 0.0
    %973 = vmatpush1.msra.mxu0 0.0
    %974 = vmatprep.subr.mxu0 0.0
    %975 = vmatpush1.msra.mxu0 0.0
    %976 = vmatprep.subr.mxu0 0.0
    %977 = vmatpush1.msra.mxu0 0.0
    %978 = vmatprep.subr.mxu0 0.0
    %979 = vmatpush1.msra.mxu0 0.0
    %980 = vmatprep.subr.mxu0 0.0
    %981 = vmatpush1.msra.mxu0 %v36
    %982 = vmatprep.subr.mxu0 0.0
    %983 = vmatpush1.msra.mxu0 %v35
    %984 = vmatprep.subr.mxu0 0.0
    %985 = vmatpush1.msra.mxu0 %v34
    %986 = vmatprep.subr.mxu0 0.0
    %987 = vmatpush1.msra.mxu0 %v33
    %988 = vmatprep.subr.mxu0 0.0
    %989 = vmatpush2.msra.mxu0 0.0
    %990 = vmatprep.subr.mxu0 0.0
    %991 = vmatpush2.msra.mxu0 0.0
    %992 = vmatprep.subr.mxu0 0.0
    %993 = vmatpush2.msra.mxu0 0.0
    %994 = vmatprep.subr.mxu0 0.0
    %995 = vmatpush2.msra.mxu0 0.0
    %996 = vmatprep.subr.mxu0 0.0
    %997 = vmatpush2.msra.mxu0 0.0
    %998 = vmatprep.subr.mxu0 0.0
    %999 = vmatpush2.msra.mxu0 0.0
    %1000 = vmatprep.subr.mxu0 0.0
    %1001 = vmatpush2.msra.mxu0 0.0
    %1002 = vmatprep.subr.mxu0 0.0
    %1003 = vmatpush2.msra.mxu0 0.0
    %1004 = vmatprep.subr.mxu0 0.0
    %1005 = vmatpush2.msra.mxu0 0.0
    %1006 = vmatprep.subr.mxu0 0.0
    %1007 = vmatpush2.msra.mxu0 0.0
    %1008 = vmatprep.subr.mxu0 0.0
    %1009 = vmatpush2.msra.mxu0 0.0
    %1010 = vmatprep.subr.mxu0 0.0
    %1011 = vmatpush2.msra.mxu0 0.0
    %1012 = vmatprep.subr.mxu0 0.0
    %1013 = vmatpush2.msra.mxu0 0.0
    %1014 = vmatprep.subr.mxu0 0.0
    %1015 = vmatpush2.msra.mxu0 0.0
    %1016 = vmatprep.subr.mxu0 0.0
    %1017 = vmatpush2.msra.mxu0 0.0
    %1018 = vmatprep.subr.mxu0 0.0
    %1019 = vmatpush2.msra.mxu0 0.0
    %1020 = vmatprep.mubr.f32.mxu0 0.0
    %1021 = vmatmul.mubr.f32.gmra.mxu0 %v954
    %v1022 = vpop.f32.mrf.mxu0
    %v1023 = vadd.f32 %v141, %v1022
    %v1024 = vpop.f32.mrf.mxu0
    %1025 = vdwg.mxu0
    %v1027 = vsel %vm142, %v879, 0
    %1029 = vmatprep.subr.mxu0 0.0
    %1030 = vmatpush1.msra.mxu0 0.0
    %1031 = vmatprep.subr.mxu0 0.0
    %1032 = vmatpush1.msra.mxu0 0.0
    %1033 = vmatprep.subr.mxu0 0.0
    %1034 = vmatpush1.msra.mxu0 0.0
    %1035 = vmatprep.subr.mxu0 0.0
    %1036 = vmatpush1.msra.mxu0 0.0
    %1037 = vmatprep.subr.mxu0 0.0
    %1038 = vmatpush1.msra.mxu0 0.0
    %1039 = vmatprep.subr.mxu0 0.0
    %1040 = vmatpush1.msra.mxu0 0.0
    %1041 = vmatprep.subr.mxu0 0.0
    %1042 = vmatpush1.msra.mxu0 0.0
    %1043 = vmatprep.subr.mxu0 0.0
    %1044 = vmatpush1.msra.mxu0 0.0
    %1045 = vmatprep.subr.mxu0 0.0
    %1046 = vmatpush1.msra.mxu0 0.0
    %1047 = vmatprep.subr.mxu0 0.0
    %1048 = vmatpush1.msra.mxu0 0.0
    %1049 = vmatprep.subr.mxu0 0.0
    %1050 = vmatpush1.msra.mxu0 0.0
    %1051 = vmatprep.subr.mxu0 0.0
    %1052 = vmatpush1.msra.mxu0 0.0
    %1053 = vmatprep.subr.mxu0 0.0
    %1054 = vmatpush1.msra.mxu0 %v32
    %1055 = vmatprep.subr.mxu0 0.0
    %1056 = vmatpush1.msra.mxu0 %v31
    %1057 = vmatprep.subr.mxu0 0.0
    %1058 = vmatpush1.msra.mxu0 %v30
    %1059 = vmatprep.subr.mxu0 0.0
    %1060 = vmatpush1.msra.mxu0 %v29
    %1061 = vmatprep.subr.mxu0 0.0
    %1062 = vmatpush2.msra.mxu0 0.0
    %1063 = vmatprep.subr.mxu0 0.0
    %1064 = vmatpush2.msra.mxu0 0.0
    %1065 = vmatprep.subr.mxu0 0.0
    %1066 = vmatpush2.msra.mxu0 0.0
    %1067 = vmatprep.subr.mxu0 0.0
    %1068 = vmatpush2.msra.mxu0 0.0
    %1069 = vmatprep.subr.mxu0 0.0
    %1070 = vmatpush2.msra.mxu0 0.0
    %1071 = vmatprep.subr.mxu0 0.0
    %1072 = vmatpush2.msra.mxu0 0.0
    %1073 = vmatprep.subr.mxu0 0.0
    %1074 = vmatpush2.msra.mxu0 0.0
    %1075 = vmatprep.subr.mxu0 0.0
    %1076 = vmatpush2.msra.mxu0 0.0
    %1077 = vmatprep.subr.mxu0 0.0
    %1078 = vmatpush2.msra.mxu0 0.0
    %1079 = vmatprep.subr.mxu0 0.0
    %1080 = vmatpush2.msra.mxu0 0.0
    %1081 = vmatprep.subr.mxu0 0.0
    %1082 = vmatpush2.msra.mxu0 0.0
    %1083 = vmatprep.subr.mxu0 0.0
    %1084 = vmatpush2.msra.mxu0 0.0
    %1085 = vmatprep.subr.mxu0 0.0
    %1086 = vmatpush2.msra.mxu0 0.0
    %1087 = vmatprep.subr.mxu0 0.0
    %1088 = vmatpush2.msra.mxu0 0.0
    %1089 = vmatprep.subr.mxu0 0.0
    %1090 = vmatpush2.msra.mxu0 0.0
    %1091 = vmatprep.subr.mxu0 0.0
    %1092 = vmatpush2.msra.mxu0 0.0
    %1093 = vmatprep.mubr.f32.mxu0 0.0
    %1094 = vmatmul.mubr.f32.gmra.mxu0 %v1027
    %v1095 = vpop.f32.mrf.mxu0
    %v1096 = vadd.f32 0.0, %v1095
    %v1097 = vpop.f32.mrf.mxu0
    %1098 = vdwg.mxu0
    %v1099 = vadd.f32 %v1023, %v1096
    %v1100 = vtanh.pop %v1099
    %v1101 = vadd.f32 %v880, %v1100
    %1102 = vmatprep.subr.mxu0 0.0
    %1103 = vmatpush1.msra.mxu0 0.0
    %1104 = vmatprep.subr.mxu0 0.0
    %1105 = vmatpush1.msra.mxu0 0.0
    %1106 = vmatprep.subr.mxu0 0.0
    %1107 = vmatpush1.msra.mxu0 0.0
    %1108 = vmatprep.subr.mxu0 0.0
    %1109 = vmatpush1.msra.mxu0 0.0
    %1110 = vmatprep.subr.mxu0 0.0
    %1111 = vmatpush1.msra.mxu0 0.0
    %1112 = vmatprep.subr.mxu0 0.0
    %1113 = vmatpush1.msra.mxu0 0.0
    %1114 = vmatprep.subr.mxu0 0.0
    %1115 = vmatpush1.msra.mxu0 0.0
    %1116 = vmatprep.subr.mxu0 0.0
    %1117 = vmatpush1.msra.mxu0 0.0
    %1118 = vmatprep.subr.mxu0 0.0
    %1119 = vmatpush1.msra.mxu0 0.0
    %1120 = vmatprep.subr.mxu0 0.0
    %1121 = vmatpush1.msra.mxu0 0.0
    %1122 = vmatprep.subr.mxu0 0.0
    %1123 = vmatpush1.msra.mxu0 0.0
    %1124 = vmatprep.subr.mxu0 0.0
    %1125 = vmatpush1.msra.mxu0 0.0
    %1126 = vmatprep.subr.mxu0 0.0
    %1127 = vmatpush1.msra.mxu0 %v28
    %1128 = vmatprep.subr.mxu0 0.0
    %1129 = vmatpush1.msra.mxu0 %v27
    %1130 = vmatprep.subr.mxu0 0.0
    %1131 = vmatpush1.msra.mxu0 %v26
    %1132 = vmatprep.subr.mxu0 0.0
    %1133 = vmatpush1.msra.mxu0 %v25
    %1134 = vmatprep.subr.mxu0 0.0
    %1135 = vmatpush2.msra.mxu0 0.0
    %1136 = vmatprep.subr.mxu0 0.0
    %1137 = vmatpush2.msra.mxu0 0.0
    %1138 = vmatprep.subr.mxu0 0.0
    %1139 = vmatpush2.msra.mxu0 0.0
    %1140 = vmatprep.subr.mxu0 0.0
    %1141 = vmatpush2.msra.mxu0 0.0
    %1142 = vmatprep.subr.mxu0 0.0
    %1143 = vmatpush2.msra.mxu0 0.0
    %1144 = vmatprep.subr.mxu0 0.0
    %1145 = vmatpush2.msra.mxu0 0.0
    %1146 = vmatprep.subr.mxu0 0.0
    %1147 = vmatpush2.msra.mxu0 0.0
    %1148 = vmatprep.subr.mxu0 0.0
    %1149 = vmatpush2.msra.mxu0 0.0
    %1150 = vmatprep.subr.mxu0 0.0
    %1151 = vmatpush2.msra.mxu0 0.0
    %1152 = vmatprep.subr.mxu0 0.0
    %1153 = vmatpush2.msra.mxu0 0.0
    %1154 = vmatprep.subr.mxu0 0.0
    %1155 = vmatpush2.msra.mxu0 0.0
    %1156 = vmatprep.subr.mxu0 0.0
    %1157 = vmatpush2.msra.mxu0 0.0
    %1158 = vmatprep.subr.mxu0 0.0
    %1159 = vmatpush2.msra.mxu0 0.0
    %1160 = vmatprep.subr.mxu0 0.0
    %1161 = vmatpush2.msra.mxu0 0.0
    %1162 = vmatprep.subr.mxu0 0.0
    %1163 = vmatpush2.msra.mxu0 0.0
    %1164 = vmatprep.subr.mxu0 0.0
    %1165 = vmatpush2.msra.mxu0 0.0
    %1166 = vmatprep.mubr.f32.mxu0 0.0
    %1167 = vmatmul.mubr.f32.gmra.mxu0 %v954
    %v1168 = vpop.f32.mrf.mxu0
    %v1169 = vadd.f32 0.0, %v1168
    %v1170 = vpop.f32.mrf.mxu0
    %1171 = vdwg.mxu0
    %v1172 = vadd.f32 %v114, %v1169
    %v1173 = vtanh.pop %v1172
    %v1175 = vsel %vm142, %v1173, 0
    %1177 = vmatprep.subr.mxu0 0.0
    %1178 = vmatpush1.msra.mxu0 0.0
    %1179 = vmatprep.subr.mxu0 0.0
    %1180 = vmatpush1.msra.mxu0 0.0
    %1181 = vmatprep.subr.mxu0 0.0
    %1182 = vmatpush1.msra.mxu0 0.0
    %1183 = vmatprep.subr.mxu0 0.0
    %1184 = vmatpush1.msra.mxu0 0.0
    %1185 = vmatprep.subr.mxu0 0.0
    %1186 = vmatpush1.msra.mxu0 0.0
    %1187 = vmatprep.subr.mxu0 0.0
    %1188 = vmatpush1.msra.mxu0 0.0
    %1189 = vmatprep.subr.mxu0 0.0
    %1190 = vmatpush1.msra.mxu0 0.0
    %1191 = vmatprep.subr.mxu0 0.0
    %1192 = vmatpush1.msra.mxu0 0.0
    %1193 = vmatprep.subr.mxu0 0.0
    %1194 = vmatpush1.msra.mxu0 0.0
    %1195 = vmatprep.subr.mxu0 0.0
    %1196 = vmatpush1.msra.mxu0 0.0
    %1197 = vmatprep.subr.mxu0 0.0
    %1198 = vmatpush1.msra.mxu0 0.0
    %1199 = vmatprep.subr.mxu0 0.0
    %1200 = vmatpush1.msra.mxu0 0.0
    %1201 = vmatprep.subr.mxu0 0.0
    %1202 = vmatpush1.msra.mxu0 %v36
    %1203 = vmatprep.subr.mxu0 0.0
    %1204 = vmatpush1.msra.mxu0 %v35
    %1205 = vmatprep.subr.mxu0 0.0
    %1206 = vmatpush1.msra.mxu0 %v34
    %1207 = vmatprep.subr.mxu0 0.0
    %1208 = vmatpush1.msra.mxu0 %v33
    %1209 = vmatprep.subr.mxu0 0.0
    %1210 = vmatpush2.msra.mxu0 0.0
    %1211 = vmatprep.subr.mxu0 0.0
    %1212 = vmatpush2.msra.mxu0 0.0
    %1213 = vmatprep.subr.mxu0 0.0
    %1214 = vmatpush2.msra.mxu0 0.0
    %1215 = vmatprep.subr.mxu0 0.0
    %1216 = vmatpush2.msra.mxu0 0.0
    %1217 = vmatprep.subr.mxu0 0.0
    %1218 = vmatpush2.msra.mxu0 0.0
    %1219 = vmatprep.subr.mxu0 0.0
    %1220 = vmatpush2.msra.mxu0 0.0
    %1221 = vmatprep.subr.mxu0 0.0
    %1222 = vmatpush2.msra.mxu0 0.0
    %1223 = vmatprep.subr.mxu0 0.0
    %1224 = vmatpush2.msra.mxu0 0.0
    %1225 = vmatprep.subr.mxu0 0.0
    %1226 = vmatpush2.msra.mxu0 0.0
    %1227 = vmatprep.subr.mxu0 0.0
    %1228 = vmatpush2.msra.mxu0 0.0
    %1229 = vmatprep.subr.mxu0 0.0
    %1230 = vmatpush2.msra.mxu0 0.0
    %1231 = vmatprep.subr.mxu0 0.0
    %1232 = vmatpush2.msra.mxu0 0.0
    %1233 = vmatprep.subr.mxu0 0.0
    %1234 = vmatpush2.msra.mxu0 0.0
    %1235 = vmatprep.subr.mxu0 0.0
    %1236 = vmatpush2.msra.mxu0 0.0
    %1237 = vmatprep.subr.mxu0 0.0
    %1238 = vmatpush2.msra.mxu0 0.0
    %1239 = vmatprep.subr.mxu0 0.0
    %1240 = vmatpush2.msra.mxu0 0.0
    %1241 = vmatprep.mubr.f32.mxu0 0.0
    %1242 = vmatmul.mubr.f32.gmra.mxu0 %v1175
    %v1243 = vpop.f32.mrf.mxu0
    %v1244 = vadd.f32 %v141, %v1243
    %v1245 = vpop.f32.mrf.mxu0
    %1246 = vdwg.mxu0
    %v1248 = vsel %vm142, %v1100, 0
    %1250 = vmatprep.subr.mxu0 0.0
    %1251 = vmatpush1.msra.mxu0 0.0
    %1252 = vmatprep.subr.mxu0 0.0
    %1253 = vmatpush1.msra.mxu0 0.0
    %1254 = vmatprep.subr.mxu0 0.0
    %1255 = vmatpush1.msra.mxu0 0.0
    %1256 = vmatprep.subr.mxu0 0.0
    %1257 = vmatpush1.msra.mxu0 0.0
    %1258 = vmatprep.subr.mxu0 0.0
    %1259 = vmatpush1.msra.mxu0 0.0
    %1260 = vmatprep.subr.mxu0 0.0
    %1261 = vmatpush1.msra.mxu0 0.0
    %1262 = vmatprep.subr.mxu0 0.0
    %1263 = vmatpush1.msra.mxu0 0.0
    %1264 = vmatprep.subr.mxu0 0.0
    %1265 = vmatpush1.msra.mxu0 0.0
    %1266 = vmatprep.subr.mxu0 0.0
    %1267 = vmatpush1.msra.mxu0 0.0
    %1268 = vmatprep.subr.mxu0 0.0
    %1269 = vmatpush1.msra.mxu0 0.0
    %1270 = vmatprep.subr.mxu0 0.0
    %1271 = vmatpush1.msra.mxu0 0.0
    %1272 = vmatprep.subr.mxu0 0.0
    %1273 = vmatpush1.msra.mxu0 0.0
    %1274 = vmatprep.subr.mxu0 0.0
    %1275 = vmatpush1.msra.mxu0 %v32
    %1276 = vmatprep.subr.mxu0 0.0
    %1277 = vmatpush1.msra.mxu0 %v31
    %1278 = vmatprep.subr.mxu0 0.0
    %1279 = vmatpush1.msra.mxu0 %v30
    %1280 = vmatprep.subr.mxu0 0.0
    %1281 = vmatpush1.msra.mxu0 %v29
    %1282 = vmatprep.subr.mxu0 0.0
    %1283 = vmatpush2.msra.mxu0 0.0
    %1284 = vmatprep.subr.mxu0 0.0
    %1285 = vmatpush2.msra.mxu0 0.0
    %1286 = vmatprep.subr.mxu0 0.0
    %1287 = vmatpush2.msra.mxu0 0.0
    %1288 = vmatprep.subr.mxu0 0.0
    %1289 = vmatpush2.msra.mxu0 0.0
    %1290 = vmatprep.subr.mxu0 0.0
    %1291 = vmatpush2.msra.mxu0 0.0
    %1292 = vmatprep.subr.mxu0 0.0
    %1293 = vmatpush2.msra.mxu0 0.0
    %1294 = vmatprep.subr.mxu0 0.0
    %1295 = vmatpush2.msra.mxu0 0.0
    %1296 = vmatprep.subr.mxu0 0.0
    %1297 = vmatpush2.msra.mxu0 0.0
    %1298 = vmatprep.subr.mxu0 0.0
    %1299 = vmatpush2.msra.mxu0 0.0
    %1300 = vmatprep.subr.mxu0 0.0
    %1301 = vmatpush2.msra.mxu0 0.0
    %1302 = vmatprep.subr.mxu0 0.0
    %1303 = vmatpush2.msra.mxu0 0.0
    %1304 = vmatprep.subr.mxu0 0.0
    %1305 = vmatpush2.msra.mxu0 0.0
    %1306 = vmatprep.subr.mxu0 0.0
    %1307 = vmatpush2.msra.mxu0 0.0
    %1308 = vmatprep.subr.mxu0 0.0
    %1309 = vmatpush2.msra.mxu0 0.0
    %1310 = vmatprep.subr.mxu0 0.0
    %1311 = vmatpush2.msra.mxu0 0.0
    %1312 = vmatprep.subr.mxu0 0.0
    %1313 = vmatpush2.msra.mxu0 0.0
    %1314 = vmatprep.mubr.f32.mxu0 0.0
    %1315 = vmatmul.mubr.f32.gmra.mxu0 %v1248
    %v1316 = vpop.f32.mrf.mxu0
    %v1317 = vadd.f32 0.0, %v1316
    %v1318 = vpop.f32.mrf.mxu0
    %1319 = vdwg.mxu0
    %v1320 = vadd.f32 %v1244, %v1317
    %v1321 = vtanh.pop %v1320
    %v1322 = vadd.f32 %v1101, %v1321
    %1323 = vmatprep.subr.mxu0 0.0
    %1324 = vmatpush1.msra.mxu0 0.0
    %1325 = vmatprep.subr.mxu0 0.0
    %1326 = vmatpush1.msra.mxu0 0.0
    %1327 = vmatprep.subr.mxu0 0.0
    %1328 = vmatpush1.msra.mxu0 0.0
    %1329 = vmatprep.subr.mxu0 0.0
    %1330 = vmatpush1.msra.mxu0 0.0
    %1331 = vmatprep.subr.mxu0 0.0
    %1332 = vmatpush1.msra.mxu0 0.0
    %1333 = vmatprep.subr.mxu0 0.0
    %1334 = vmatpush1.msra.mxu0 0.0
    %1335 = vmatprep.subr.mxu0 0.0
    %1336 = vmatpush1.msra.mxu0 0.0
    %1337 = vmatprep.subr.mxu0 0.0
    %1338 = vmatpush1.msra.mxu0 0.0
    %1339 = vmatprep.subr.mxu0 0.0
    %1340 = vmatpush1.msra.mxu0 0.0
    %1341 = vmatprep.subr.mxu0 0.0
    %1342 = vmatpush1.msra.mxu0 0.0
    %1343 = vmatprep.subr.mxu0 0.0
    %1344 = vmatpush1.msra.mxu0 0.0
    %1345 = vmatprep.subr.mxu0 0.0
    %1346 = vmatpush1.msra.mxu0 0.0
    %1347 = vmatprep.subr.mxu0 0.0
    %1348 = vmatpush1.msra.mxu0 %v28
    %1349 = vmatprep.subr.mxu0 0.0
    %1350 = vmatpush1.msra.mxu0 %v27
    %1351 = vmatprep.subr.mxu0 0.0
    %1352 = vmatpush1.msra.mxu0 %v26
    %1353 = vmatprep.subr.mxu0 0.0
    %1354 = vmatpush1.msra.mxu0 %v25
    %1355 = vmatprep.subr.mxu0 0.0
    %1356 = vmatpush2.msra.mxu0 0.0
    %1357 = vmatprep.subr.mxu0 0.0
    %1358 = vmatpush2.msra.mxu0 0.0
    %1359 = vmatprep.subr.mxu0 0.0
    %1360 = vmatpush2.msra.mxu0 0.0
    %1361 = vmatprep.subr.mxu0 0.0
    %1362 = vmatpush2.msra.mxu0 0.0
    %1363 = vmatprep.subr.mxu0 0.0
    %1364 = vmatpush2.msra.mxu0 0.0
    %1365 = vmatprep.subr.mxu0 0.0
    %1366 = vmatpush2.msra.mxu0 0.0
    %1367 = vmatprep.subr.mxu0 0.0
    %1368 = vmatpush2.msra.mxu0 0.0
    %1369 = vmatprep.subr.mxu0 0.0
    %1370 = vmatpush2.msra.mxu0 0.0
    %1371 = vmatprep.subr.mxu0 0.0
    %1372 = vmatpush2.msra.mxu0 0.0
    %1373 = vmatprep.subr.mxu0 0.0
    %1374 = vmatpush2.msra.mxu0 0.0
    %1375 = vmatprep.subr.mxu0 0.0
    %1376 = vmatpush2.msra.mxu0 0.0
    %1377 = vmatprep.subr.mxu0 0.0
    %1378 = vmatpush2.msra.mxu0 0.0
    %1379 = vmatprep.subr.mxu0 0.0
    %1380 = vmatpush2.msra.mxu0 0.0
    %1381 = vmatprep.subr.mxu0 0.0
    %1382 = vmatpush2.msra.mxu0 0.0
    %1383 = vmatprep.subr.mxu0 0.0
    %1384 = vmatpush2.msra.mxu0 0.0
    %1385 = vmatprep.subr.mxu0 0.0
    %1386 = vmatpush2.msra.mxu0 0.0
    %1387 = vmatprep.mubr.f32.mxu0 0.0
    %1388 = vmatmul.mubr.f32.gmra.mxu0 %v1175
    %v1389 = vpop.f32.mrf.mxu0
    %v1390 = vadd.f32 0.0, %v1389
    %v1391 = vpop.f32.mrf.mxu0
    %1392 = vdwg.mxu0
    %v1393 = vadd.f32 %v125, %v1390
    %v1394 = vtanh.pop %v1393
    %v1396 = vsel %vm142, %v1394, 0
    %1398 = vmatprep.subr.mxu0 0.0
    %1399 = vmatpush1.msra.mxu0 0.0
    %1400 = vmatprep.subr.mxu0 0.0
    %1401 = vmatpush1.msra.mxu0 0.0
    %1402 = vmatprep.subr.mxu0 0.0
    %1403 = vmatpush1.msra.mxu0 0.0
    %1404 = vmatprep.subr.mxu0 0.0
    %1405 = vmatpush1.msra.mxu0 0.0
    %1406 = vmatprep.subr.mxu0 0.0
    %1407 = vmatpush1.msra.mxu0 0.0
    %1408 = vmatprep.subr.mxu0 0.0
    %1409 = vmatpush1.msra.mxu0 0.0
    %1410 = vmatprep.subr.mxu0 0.0
    %1411 = vmatpush1.msra.mxu0 0.0
    %1412 = vmatprep.subr.mxu0 0.0
    %1413 = vmatpush1.msra.mxu0 0.0
    %1414 = vmatprep.subr.mxu0 0.0
    %1415 = vmatpush1.msra.mxu0 0.0
    %1416 = vmatprep.subr.mxu0 0.0
    %1417 = vmatpush1.msra.mxu0 0.0
    %1418 = vmatprep.subr.mxu0 0.0
    %1419 = vmatpush1.msra.mxu0 0.0
    %1420 = vmatprep.subr.mxu0 0.0
    %1421 = vmatpush1.msra.mxu0 0.0
    %1422 = vmatprep.subr.mxu0 0.0
    %1423 = vmatpush1.msra.mxu0 %v36
    %1424 = vmatprep.subr.mxu0 0.0
    %1425 = vmatpush1.msra.mxu0 %v35
    %1426 = vmatprep.subr.mxu0 0.0
    %1427 = vmatpush1.msra.mxu0 %v34
    %1428 = vmatprep.subr.mxu0 0.0
    %1429 = vmatpush1.msra.mxu0 %v33
    %1430 = vmatprep.subr.mxu0 0.0
    %1431 = vmatpush2.msra.mxu0 0.0
    %1432 = vmatprep.subr.mxu0 0.0
    %1433 = vmatpush2.msra.mxu0 0.0
    %1434 = vmatprep.subr.mxu0 0.0
    %1435 = vmatpush2.msra.mxu0 0.0
    %1436 = vmatprep.subr.mxu0 0.0
    %1437 = vmatpush2.msra.mxu0 0.0
    %1438 = vmatprep.subr.mxu0 0.0
    %1439 = vmatpush2.msra.mxu0 0.0
    %1440 = vmatprep.subr.mxu0 0.0
    %1441 = vmatpush2.msra.mxu0 0.0
    %1442 = vmatprep.subr.mxu0 0.0
    %1443 = vmatpush2.msra.mxu0 0.0
    %1444 = vmatprep.subr.mxu0 0.0
    %1445 = vmatpush2.msra.mxu0 0.0
    %1446 = vmatprep.subr.mxu0 0.0
    %1447 = vmatpush2.msra.mxu0 0.0
    %1448 = vmatprep.subr.mxu0 0.0
    %1449 = vmatpush2.msra.mxu0 0.0
    %1450 = vmatprep.subr.mxu0 0.0
    %1451 = vmatpush2.msra.mxu0 0.0
    %1452 = vmatprep.subr.mxu0 0.0
    %1453 = vmatpush2.msra.mxu0 0.0
    %1454 = vmatprep.subr.mxu0 0.0
    %1455 = vmatpush2.msra.mxu0 0.0
    %1456 = vmatprep.subr.mxu0 0.0
    %1457 = vmatpush2.msra.mxu0 0.0
    %1458 = vmatprep.subr.mxu0 0.0
    %1459 = vmatpush2.msra.mxu0 0.0
    %1460 = vmatprep.subr.mxu0 0.0
    %1461 = vmatpush2.msra.mxu0 0.0
    %1462 = vmatprep.mubr.f32.mxu0 0.0
    %1463 = vmatmul.mubr.f32.gmra.mxu0 %v1396
    %v1464 = vpop.f32.mrf.mxu0
    %v1465 = vadd.f32 %v141, %v1464
    %v1466 = vpop.f32.mrf.mxu0
    %1467 = vdwg.mxu0
    %v1469 = vsel %vm142, %v1321, 0
    %1471 = vmatprep.subr.mxu0 0.0
    %1472 = vmatpush1.msra.mxu0 0.0
    %1473 = vmatprep.subr.mxu0 0.0
    %1474 = vmatpush1.msra.mxu0 0.0
    %1475 = vmatprep.subr.mxu0 0.0
    %1476 = vmatpush1.msra.mxu0 0.0
    %1477 = vmatprep.subr.mxu0 0.0
    %1478 = vmatpush1.msra.mxu0 0.0
    %1479 = vmatprep.subr.mxu0 0.0
    %1480 = vmatpush1.msra.mxu0 0.0
    %1481 = vmatprep.subr.mxu0 0.0
    %1482 = vmatpush1.msra.mxu0 0.0
    %1483 = vmatprep.subr.mxu0 0.0
    %1484 = vmatpush1.msra.mxu0 0.0
    %1485 = vmatprep.subr.mxu0 0.0
    %1486 = vmatpush1.msra.mxu0 0.0
    %1487 = vmatprep.subr.mxu0 0.0
    %1488 = vmatpush1.msra.mxu0 0.0
    %1489 = vmatprep.subr.mxu0 0.0
    %1490 = vmatpush1.msra.mxu0 0.0
    %1491 = vmatprep.subr.mxu0 0.0
    %1492 = vmatpush1.msra.mxu0 0.0
    %1493 = vmatprep.subr.mxu0 0.0
    %1494 = vmatpush1.msra.mxu0 0.0
    %1495 = vmatprep.subr.mxu0 0.0
    %1496 = vmatpush1.msra.mxu0 %v32
    %1497 = vmatprep.subr.mxu0 0.0
    %1498 = vmatpush1.msra.mxu0 %v31
    %1499 = vmatprep.subr.mxu0 0.0
    %1500 = vmatpush1.msra.mxu0 %v30
    %1501 = vmatprep.subr.mxu0 0.0
    %1502 = vmatpush1.msra.mxu0 %v29
    %1503 = vmatprep.subr.mxu0 0.0
    %1504 = vmatpush2.msra.mxu0 0.0
    %1505 = vmatprep.subr.mxu0 0.0
    %1506 = vmatpush2.msra.mxu0 0.0
    %1507 = vmatprep.subr.mxu0 0.0
    %1508 = vmatpush2.msra.mxu0 0.0
    %1509 = vmatprep.subr.mxu0 0.0
    %1510 = vmatpush2.msra.mxu0 0.0
    %1511 = vmatprep.subr.mxu0 0.0
    %1512 = vmatpush2.msra.mxu0 0.0
    %1513 = vmatprep.subr.mxu0 0.0
    %1514 = vmatpush2.msra.mxu0 0.0
    %1515 = vmatprep.subr.mxu0 0.0
    %1516 = vmatpush2.msra.mxu0 0.0
    %1517 = vmatprep.subr.mxu0 0.0
    %1518 = vmatpush2.msra.mxu0 0.0
    %1519 = vmatprep.subr.mxu0 0.0
    %1520 = vmatpush2.msra.mxu0 0.0
    %1521 = vmatprep.subr.mxu0 0.0
    %1522 = vmatpush2.msra.mxu0 0.0
    %1523 = vmatprep.subr.mxu0 0.0
    %1524 = vmatpush2.msra.mxu0 0.0
    %1525 = vmatprep.subr.mxu0 0.0
    %1526 = vmatpush2.msra.mxu0 0.0
    %1527 = vmatprep.subr.mxu0 0.0
    %1528 = vmatpush2.msra.mxu0 0.0
    %1529 = vmatprep.subr.mxu0 0.0
    %1530 = vmatpush2.msra.mxu0 0.0
    %1531 = vmatprep.subr.mxu0 0.0
    %1532 = vmatpush2.msra.mxu0 0.0
    %1533 = vmatprep.subr.mxu0 0.0
    %1534 = vmatpush2.msra.mxu0 0.0
    %1535 = vmatprep.mubr.f32.mxu0 0.0
    %1536 = vmatmul.mubr.f32.gmra.mxu0 %v1469
    %v1537 = vpop.f32.mrf.mxu0
    %v1538 = vadd.f32 0.0, %v1537
    %v1539 = vpop.f32.mrf.mxu0
    %1540 = vdwg.mxu0
    %v1541 = vadd.f32 %v1465, %v1538
    %v1542 = vtanh.pop %v1541
    %v1543 = vadd.f32 %v1322, %v1542
    %1544 = vmatprep.subr.mxu0 0.0
    %1545 = vmatpush1.msra.mxu0 0.0
    %1546 = vmatprep.subr.mxu0 0.0
    %1547 = vmatpush1.msra.mxu0 0.0
    %1548 = vmatprep.subr.mxu0 0.0
    %1549 = vmatpush1.msra.mxu0 0.0
    %1550 = vmatprep.subr.mxu0 0.0
    %1551 = vmatpush1.msra.mxu0 0.0
    %1552 = vmatprep.subr.mxu0 0.0
    %1553 = vmatpush1.msra.mxu0 0.0
    %1554 = vmatprep.subr.mxu0 0.0
    %1555 = vmatpush1.msra.mxu0 0.0
    %1556 = vmatprep.subr.mxu0 0.0
    %1557 = vmatpush1.msra.mxu0 0.0
    %1558 = vmatprep.subr.mxu0 0.0
    %1559 = vmatpush1.msra.mxu0 0.0
    %1560 = vmatprep.subr.mxu0 0.0
    %1561 = vmatpush1.msra.mxu0 0.0
    %1562 = vmatprep.subr.mxu0 0.0
    %1563 = vmatpush1.msra.mxu0 0.0
    %1564 = vmatprep.subr.mxu0 0.0
    %1565 = vmatpush1.msra.mxu0 0.0
    %1566 = vmatprep.subr.mxu0 0.0
    %1567 = vmatpush1.msra.mxu0 0.0
    %1568 = vmatprep.subr.mxu0 0.0
    %1569 = vmatpush1.msra.mxu0 %v28
    %1570 = vmatprep.subr.mxu0 0.0
    %1571 = vmatpush1.msra.mxu0 %v27
    %1572 = vmatprep.subr.mxu0 0.0
    %1573 = vmatpush1.msra.mxu0 %v26
    %1574 = vmatprep.subr.mxu0 0.0
    %1575 = vmatpush1.msra.mxu0 %v25
    %1576 = vmatprep.subr.mxu0 0.0
    %1577 = vmatpush2.msra.mxu0 0.0
    %1578 = vmatprep.subr.mxu0 0.0
    %1579 = vmatpush2.msra.mxu0 0.0
    %1580 = vmatprep.subr.mxu0 0.0
    %1581 = vmatpush2.msra.mxu0 0.0
    %1582 = vmatprep.subr.mxu0 0.0
    %1583 = vmatpush2.msra.mxu0 0.0
    %1584 = vmatprep.subr.mxu0 0.0
    %1585 = vmatpush2.msra.mxu0 0.0
    %1586 = vmatprep.subr.mxu0 0.0
    %1587 = vmatpush2.msra.mxu0 0.0
    %1588 = vmatprep.subr.mxu0 0.0
    %1589 = vmatpush2.msra.mxu0 0.0
    %1590 = vmatprep.subr.mxu0 0.0
    %1591 = vmatpush2.msra.mxu0 0.0
    %1592 = vmatprep.subr.mxu0 0.0
    %1593 = vmatpush2.msra.mxu0 0.0
    %1594 = vmatprep.subr.mxu0 0.0
    %1595 = vmatpush2.msra.mxu0 0.0
    %1596 = vmatprep.subr.mxu0 0.0
    %1597 = vmatpush2.msra.mxu0 0.0
    %1598 = vmatprep.subr.mxu0 0.0
    %1599 = vmatpush2.msra.mxu0 0.0
    %1600 = vmatprep.subr.mxu0 0.0
    %1601 = vmatpush2.msra.mxu0 0.0
    %1602 = vmatprep.subr.mxu0 0.0
    %1603 = vmatpush2.msra.mxu0 0.0
    %1604 = vmatprep.subr.mxu0 0.0
    %1605 = vmatpush2.msra.mxu0 0.0
    %1606 = vmatprep.subr.mxu0 0.0
    %1607 = vmatpush2.msra.mxu0 0.0
    %1608 = vmatprep.mubr.f32.mxu0 0.0
    %1609 = vmatmul.mubr.f32.gmra.mxu0 %v1396
    %v1610 = vpop.f32.mrf.mxu0
    %v1611 = vadd.f32 0.0, %v1610
    %v1612 = vpop.f32.mrf.mxu0
    %1613 = vdwg.mxu0
    %v1614 = vadd.f32 %v136, %v1611
    %v1615 = vtanh.pop %v1614
    %v1617 = vsel %vm142, %v1615, 0
    %1619 = vmatprep.subr.mxu0 0.0
    %1620 = vmatpush1.msra.mxu0 0.0
    %1621 = vmatprep.subr.mxu0 0.0
    %1622 = vmatpush1.msra.mxu0 0.0
    %1623 = vmatprep.subr.mxu0 0.0
    %1624 = vmatpush1.msra.mxu0 0.0
    %1625 = vmatprep.subr.mxu0 0.0
    %1626 = vmatpush1.msra.mxu0 0.0
    %1627 = vmatprep.subr.mxu0 0.0
    %1628 = vmatpush1.msra.mxu0 0.0
    %1629 = vmatprep.subr.mxu0 0.0
    %1630 = vmatpush1.msra.mxu0 0.0
    %1631 = vmatprep.subr.mxu0 0.0
    %1632 = vmatpush1.msra.mxu0 0.0
    %1633 = vmatprep.subr.mxu0 0.0
    %1634 = vmatpush1.msra.mxu0 0.0
    %1635 = vmatprep.subr.mxu0 0.0
    %1636 = vmatpush1.msra.mxu0 0.0
    %1637 = vmatprep.subr.mxu0 0.0
    %1638 = vmatpush1.msra.mxu0 0.0
    %1639 = vmatprep.subr.mxu0 0.0
    %1640 = vmatpush1.msra.mxu0 0.0
    %1641 = vmatprep.subr.mxu0 0.0
    %1642 = vmatpush1.msra.mxu0 0.0
    %1643 = vmatprep.subr.mxu0 0.0
    %1644 = vmatpush1.msra.mxu0 %v36
    %1645 = vmatprep.subr.mxu0 0.0
    %1646 = vmatpush1.msra.mxu0 %v35
    %1647 = vmatprep.subr.mxu0 0.0
    %1648 = vmatpush1.msra.mxu0 %v34
    %1649 = vmatprep.subr.mxu0 0.0
    %1650 = vmatpush1.msra.mxu0 %v33
    %1651 = vmatprep.subr.mxu0 0.0
    %1652 = vmatpush2.msra.mxu0 0.0
    %1653 = vmatprep.subr.mxu0 0.0
    %1654 = vmatpush2.msra.mxu0 0.0
    %1655 = vmatprep.subr.mxu0 0.0
    %1656 = vmatpush2.msra.mxu0 0.0
    %1657 = vmatprep.subr.mxu0 0.0
    %1658 = vmatpush2.msra.mxu0 0.0
    %1659 = vmatprep.subr.mxu0 0.0
    %1660 = vmatpush2.msra.mxu0 0.0
    %1661 = vmatprep.subr.mxu0 0.0
    %1662 = vmatpush2.msra.mxu0 0.0
    %1663 = vmatprep.subr.mxu0 0.0
    %1664 = vmatpush2.msra.mxu0 0.0
    %1665 = vmatprep.subr.mxu0 0.0
    %1666 = vmatpush2.msra.mxu0 0.0
    %1667 = vmatprep.subr.mxu0 0.0
    %1668 = vmatpush2.msra.mxu0 0.0
    %1669 = vmatprep.subr.mxu0 0.0
    %1670 = vmatpush2.msra.mxu0 0.0
    %1671 = vmatprep.subr.mxu0 0.0
    %1672 = vmatpush2.msra.mxu0 0.0
    %1673 = vmatprep.subr.mxu0 0.0
    %1674 = vmatpush2.msra.mxu0 0.0
    %1675 = vmatprep.subr.mxu0 0.0
    %1676 = vmatpush2.msra.mxu0 0.0
    %1677 = vmatprep.subr.mxu0 0.0
    %1678 = vmatpush2.msra.mxu0 0.0
    %1679 = vmatprep.subr.mxu0 0.0
    %1680 = vmatpush2.msra.mxu0 0.0
    %1681 = vmatprep.subr.mxu0 0.0
    %1682 = vmatpush2.msra.mxu0 0.0
    %1683 = vmatprep.mubr.f32.mxu0 0.0
    %1684 = vmatmul.mubr.f32.gmra.mxu0 %v1617
    %v1685 = vpop.f32.mrf.mxu0
    %v1686 = vadd.f32 %v141, %v1685
    %v1687 = vpop.f32.mrf.mxu0
    %1688 = vdwg.mxu0
    %v1690 = vsel %vm142, %v1542, 0
    %1692 = vmatprep.subr.mxu0 0.0
    %1693 = vmatpush1.msra.mxu0 0.0
    %1694 = vmatprep.subr.mxu0 0.0
    %1695 = vmatpush1.msra.mxu0 0.0
    %1696 = vmatprep.subr.mxu0 0.0
    %1697 = vmatpush1.msra.mxu0 0.0
    %1698 = vmatprep.subr.mxu0 0.0
    %1699 = vmatpush1.msra.mxu0 0.0
    %1700 = vmatprep.subr.mxu0 0.0
    %1701 = vmatpush1.msra.mxu0 0.0
    %1702 = vmatprep.subr.mxu0 0.0
    %1703 = vmatpush1.msra.mxu0 0.0
    %1704 = vmatprep.subr.mxu0 0.0
    %1705 = vmatpush1.msra.mxu0 0.0
    %1706 = vmatprep.subr.mxu0 0.0
    %1707 = vmatpush1.msra.mxu0 0.0
    %1708 = vmatprep.subr.mxu0 0.0
    %1709 = vmatpush1.msra.mxu0 0.0
    %1710 = vmatprep.subr.mxu0 0.0
    %1711 = vmatpush1.msra.mxu0 0.0
    %1712 = vmatprep.subr.mxu0 0.0
    %1713 = vmatpush1.msra.mxu0 0.0
    %1714 = vmatprep.subr.mxu0 0.0
    %1715 = vmatpush1.msra.mxu0 0.0
    %1716 = vmatprep.subr.mxu0 0.0
    %1717 = vmatpush1.msra.mxu0 %v32
    %1718 = vmatprep.subr.mxu0 0.0
    %1719 = vmatpush1.msra.mxu0 %v31
    %1720 = vmatprep.subr.mxu0 0.0
    %1721 = vmatpush1.msra.mxu0 %v30
    %1722 = vmatprep.subr.mxu0 0.0
    %1723 = vmatpush1.msra.mxu0 %v29
    %1724 = vmatprep.subr.mxu0 0.0
    %1725 = vmatpush2.msra.mxu0 0.0
    %1726 = vmatprep.subr.mxu0 0.0
    %1727 = vmatpush2.msra.mxu0 0.0
    %1728 = vmatprep.subr.mxu0 0.0
    %1729 = vmatpush2.msra.mxu0 0.0
    %1730 = vmatprep.subr.mxu0 0.0
    %1731 = vmatpush2.msra.mxu0 0.0
    %1732 = vmatprep.subr.mxu0 0.0
    %1733 = vmatpush2.msra.mxu0 0.0
    %1734 = vmatprep.subr.mxu0 0.0
    %1735 = vmatpush2.msra.mxu0 0.0
    %1736 = vmatprep.subr.mxu0 0.0
    %1737 = vmatpush2.msra.mxu0 0.0
    %1738 = vmatprep.subr.mxu0 0.0
    %1739 = vmatpush2.msra.mxu0 0.0
    %1740 = vmatprep.subr.mxu0 0.0
    %1741 = vmatpush2.msra.mxu0 0.0
    %1742 = vmatprep.subr.mxu0 0.0
    %1743 = vmatpush2.msra.mxu0 0.0
    %1744 = vmatprep.subr.mxu0 0.0
    %1745 = vmatpush2.msra.mxu0 0.0
    %1746 = vmatprep.subr.mxu0 0.0
    %1747 = vmatpush2.msra.mxu0 0.0
    %1748 = vmatprep.subr.mxu0 0.0
    %1749 = vmatpush2.msra.mxu0 0.0
    %1750 = vmatprep.subr.mxu0 0.0
    %1751 = vmatpush2.msra.mxu0 0.0
    %1752 = vmatprep.subr.mxu0 0.0
    %1753 = vmatpush2.msra.mxu0 0.0
    %1754 = vmatprep.subr.mxu0 0.0
    %1755 = vmatpush2.msra.mxu0 0.0
    %1756 = vmatprep.mubr.f32.mxu0 0.0
    %1757 = vmatmul.mubr.f32.gmra.mxu0 %v1690
    %v1758 = vpop.f32.mrf.mxu0
    %v1759 = vadd.f32 0.0, %v1758
    %v1760 = vpop.f32.mrf.mxu0
    %1761 = vdwg.mxu0
    %v1762 = vadd.f32 %v1686, %v1759
    %v1763 = vtanh.pop %v1762
    %v1764 = vadd.f32 %v1543, %v1763
    %v1765 = vmul.f32 %v1764, 0.125
    %v1766 = vlaneseq
    %v1767 = vshrl.u32 %v1766, 7
    %v1768 = vsub.s32 0, %v1767
    %v1769 = vrot.slane %v43, %v1768
    %v1771 = vsel %vm142, %v1765, 0
    %1773 = vmatprep.subr.mxu0 0.0
    %1774 = vmatpush1.msra.mxu0 0.0
    %1775 = vmatprep.subr.mxu0 0.0
    %1776 = vmatpush1.msra.mxu0 0.0
    %1777 = vmatprep.subr.mxu0 0.0
    %1778 = vmatpush1.msra.mxu0 0.0
    %1779 = vmatprep.subr.mxu0 0.0
    %1780 = vmatpush1.msra.mxu0 0.0
    %1781 = vmatprep.subr.mxu0 0.0
    %1782 = vmatpush1.msra.mxu0 0.0
    %1783 = vmatprep.subr.mxu0 0.0
    %1784 = vmatpush1.msra.mxu0 0.0
    %1785 = vmatprep.subr.mxu0 0.0
    %1786 = vmatpush1.msra.mxu0 0.0
    %1787 = vmatprep.subr.mxu0 0.0
    %1788 = vmatpush1.msra.mxu0 0.0
    %1789 = vmatprep.subr.mxu0 0.0
    %1790 = vmatpush1.msra.mxu0 0.0
    %1791 = vmatprep.subr.mxu0 0.0
    %1792 = vmatpush1.msra.mxu0 0.0
    %1793 = vmatprep.subr.mxu0 0.0
    %1794 = vmatpush1.msra.mxu0 0.0
    %1795 = vmatprep.subr.mxu0 0.0
    %1796 = vmatpush1.msra.mxu0 0.0
    %1797 = vmatprep.subr.mxu0 0.0
    %1798 = vmatpush1.msra.mxu0 %v42
    %1799 = vmatprep.subr.mxu0 0.0
    %1800 = vmatpush1.msra.mxu0 %v41
    %1801 = vmatprep.subr.mxu0 0.0
    %1802 = vmatpush1.msra.mxu0 %v40
    %1803 = vmatprep.subr.mxu0 0.0
    %1804 = vmatpush1.msra.mxu0 %v39
    %1805 = vmatprep.subr.mxu0 0.0
    %1806 = vmatpush2.msra.mxu0 0.0
    %1807 = vmatprep.subr.mxu0 0.0
    %1808 = vmatpush2.msra.mxu0 0.0
    %1809 = vmatprep.subr.mxu0 0.0
    %1810 = vmatpush2.msra.mxu0 0.0
    %1811 = vmatprep.subr.mxu0 0.0
    %1812 = vmatpush2.msra.mxu0 0.0
    %1813 = vmatprep.subr.mxu0 0.0
    %1814 = vmatpush2.msra.mxu0 0.0
    %1815 = vmatprep.subr.mxu0 0.0
    %1816 = vmatpush2.msra.mxu0 0.0
    %1817 = vmatprep.subr.mxu0 0.0
    %1818 = vmatpush2.msra.mxu0 0.0
    %1819 = vmatprep.subr.mxu0 0.0
    %1820 = vmatpush2.msra.mxu0 0.0
    %1821 = vmatprep.subr.mxu0 0.0
    %1822 = vmatpush2.msra.mxu0 0.0
    %1823 = vmatprep.subr.mxu0 0.0
    %1824 = vmatpush2.msra.mxu0 0.0
    %1825 = vmatprep.subr.mxu0 0.0
    %1826 = vmatpush2.msra.mxu0 0.0
    %1827 = vmatprep.subr.mxu0 0.0
    %1828 = vmatpush2.msra.mxu0 0.0
    %1829 = vmatprep.subr.mxu0 0.0
    %1830 = vmatpush2.msra.mxu0 0.0
    %1831 = vmatprep.subr.mxu0 0.0
    %1832 = vmatpush2.msra.mxu0 0.0
    %1833 = vmatprep.subr.mxu0 0.0
    %1834 = vmatpush2.msra.mxu0 0.0
    %1835 = vmatprep.subr.mxu0 0.0
    %1836 = vmatpush2.msra.mxu0 0.0
    %1837 = vmatprep.mubr.f32.mxu0 0.0
    %1838 = vmatmul.mubr.f32.gmra.mxu0 %v1771
    %v1839 = vpop.f32.mrf.mxu0
    %v1840 = vadd.f32 %v1769, %v1839
    %v1841 = vpop.f32.mrf.mxu0
    %1842 = vdwg.mxu0
    %vm1843 = vcmask 254976
    %v1844 = vsel %vm1843, %v1840, -inf
    %1845 = vmax.xlane.f32.xlu0 %v1844
    %v1846 = vpop.xlane.xlu0 %1845
    %v1847 = vsub.f32 %v1840, %v1846
    %v1848 = vmul.f32 %v1847, 1.442695
    %v1849 = vpow.pop %v1848
    %v1850 = vsel %vm1843, %v1849, 0.0
    %1851 = vadd.xlane.f32.xlu0 %v1850
    %v1852 = vpop.xlane.xlu0 %1851
    %v1853 = vlog2.pop %v1852
    %v1854 = vmul.f32 %v1853, 0.6931472
    %v1855 = vsub.f32 %v1847, %v1854
    %vm1856 = vcmask 74752
    %1857 = vst.msk [vmem:[#allocation5] sm:$0x3] %vm1856, %v1855
    // Predicated region
    $region14: #{tpu_custom_call.1} parent=1 // pred_check
      _
    $region15: #{tpu_custom_call.1} parent=1 // pred_check_branch
      %1859 = sbr.rel (0) target = $region17
    $region16: #{tpu_custom_call.1} parent=1 // pred_region
      %s1861 = ssub.s32 32, 32
      %1862 = vsyncadd [#allocation3], %s1861
      %s1864 = sshll.u32 [#allocation5], 4
      %s1865 = int_to_ptr.vmem [resolvable:$true] %s1864
      %1867 = dma.vmem_to_hbm [thread:$0]  %s1865, 32, %s2, [#allocation3]
    $region17: #{tpu_custom_call.1} parent=1 // pred_fallthru
      _
    // Predicated region
    $region18: #{tpu_custom_call.1} parent=1 // pred_check
      _
    $region19: #{tpu_custom_call.1} parent=1 // pred_check_branch
      %1869 = sbr.rel (0) target = $region21
    $region20: #{tpu_custom_call.1} parent=1 // pred_region
      %1870 = dma.done [#allocation3], 32
    $region21: #{tpu_custom_call.1} parent=1 // pred_fallthru
      _
    %1871 = vsyncpa [#allocation3], 1
    %1872 = vsyncpa [#allocation4], 1

</llo_original>
